<compile_context>
chip_gen: v7x
topology: tpu7x:2x2x1
jax: 0.10.0
libtpu: 0.0.40
codegen_flags: <defaults>
</compile_context>

<pallas_src>
import jax
import jax.numpy as jnp
from jax import lax
from jax.experimental import pallas as pl
from jax.experimental.pallas import tpu as pltpu

IN_DIM = 54      # in_dim in the module
IN_PAD = 64      # padded fc_0 input width (lane-friendly)
FC0_DIM = 16     # nn.Linear(in_dim, 16)
TEXT_DIM = 32    # args.text_dim


def ae_textencoder_kernel(
    x_ref,        # (T, 2B, IN_PAD)  rows[:B]=x[t], rows[B:]=x[T-1-t], zero-padded
    w0t_ref,      # (IN_PAD, FC0_DIM)   fc_0 weight, pre-transposed + padded
    b0_ref,       # (1, FC0_DIM)
    wihw_ref,     # (FC0_DIM, 8H)    [Wih_fwd^T | Wih_bwd^T], sigmoid-cols pre-scaled by 0.5
    bcomb_ref,    # (2B, 4H)         rows[:B]=b_fwd, rows[B:]=b_bwd, pre-scaled
    whhw_ref,     # (H, 8H) bf16     [Whh_fwd^T | Whh_bwd^T], pre-scaled
    wfcnf_ref,    # (H, H)           Wfcn[:, :H]^T
    wfcnb_ref,    # (H, H)           Wfcn[:, H:]^T
    bfcn_ref,     # (1, H)
    out_ref,      # (T*B, H)         flat time-major output
    gates_sc,     # scratch (T, 2B, 4H)  hoisted, row-combined input projections
    h_sc,         # scratch (T, 2B, H)   combined hidden states
):
    T, B2, Din = x_ref.shape
    B = B2 // 2
    H = wfcnf_ref.shape[0]
    G4 = 4 * H

    # rows [:B] are the forward direction, rows [B:] the (time-reversed) backward one.
    row_is_fwd = lax.broadcasted_iota(jnp.int32, (B2, 1), 0) < B

    # Fused-sigmoid constants. Gate layout [i|f|g|o]; the 0.5 *input* scale is
    # already folded into wih/whh/bias columns, so per step only the post-tanh
    # affine remains:  sigmoid lanes: 0.5*t + 0.5,  g lanes: 1*t + 0.
    lane = lax.broadcasted_iota(jnp.int32, (1, G4), 1)
    is_g = (lane >= 2 * H) & (lane < 3 * H)
    beta = jnp.where(is_g, 1.0, 0.5).astype(jnp.float32)
    gamma = jnp.where(is_g, 0.0, 0.5).astype(jnp.float32)

    # ---- hoisted fc_0 + input projections (both directions, all timesteps) ----
    x2 = x_ref[...].reshape(T * B2, Din)
    y = jnp.tanh(
        jnp.dot(x2, w0t_ref[...], preferred_element_type=jnp.float32)
        + b0_ref[...]
    )                                                       # (T*2B, FC0_DIM)
    gih = jnp.dot(y, wihw_ref[...], preferred_element_type=jnp.float32)
    gih = gih.reshape(T, B2, 2 * G4)                        # [fwd gates | bwd gates]
    g_in = jnp.where(row_is_fwd[None], gih[:, :, :G4], gih[:, :, G4:]) + bcomb_ref[...]
    gates_sc[...] = g_in                                    # (T, 2B, 4H)

    whh = whhw_ref[...]                                     # (H, 8H) bf16

    # ---- fused bidirectional recurrence: ONE dot + ONE gate slab per step ----
    def body(t, carry):
        h, c = carry                                        # h (2B,H) bf16, c (2B,H) f32
        gw = jnp.dot(h, whh, preferred_element_type=jnp.float32)   # (2B, 8H)
        g = gates_sc[t] + jnp.where(row_is_fwd, gw[:, :G4], gw[:, G4:])
        v = jnp.tanh(g) * beta + gamma                      # single EUP pass, (2B, 4H)
        i = v[:, 0:H]
        f = v[:, H:2 * H]
        gg = v[:, 2 * H:3 * H]
        o = v[:, 3 * H:4 * H]
        c_new = f * c + i * gg
        h_new = o * jnp.tanh(c_new)                         # (2B, H)
        h_sc[t] = h_new                                     # one store per step
        return h_new.astype(jnp.bfloat16), c_new

    h0 = jnp.zeros((B2, H), jnp.bfloat16)
    c0 = jnp.zeros((B2, H), jnp.float32)
    lax.fori_loop(0, T, body, (h0, c0), unroll=min(T, 16))

    # ---- FCN: tanh(hf @ Wf + hb @ Wb + b) ----
    h_all = h_sc[...]                                       # (T, 2B, H)
    hf = h_all[:, :B, :].reshape(T * B, H)
    # backward hidden for original time t lives at scratch time T-1-t (static gather)
    hb = jnp.concatenate([h_all[T - 1 - t, B:, :] for t in range(T)], axis=0)
    o = jnp.tanh(
        jnp.dot(hf, wfcnf_ref[...], preferred_element_type=jnp.float32)
        + jnp.dot(hb, wfcnb_ref[...], preferred_element_type=jnp.float32)
        + bfcn_ref[...]
    )
    out_ref[...] = o                                        # (T*B, H)


def _ae_textencoder_impl(x, params):
    B, T, _ = x.shape
    H = TEXT_DIM
    G4 = 4 * H

    # Layout / weight prep once in XLA, outside the serial kernel region.
    x_tm = jnp.transpose(x, (1, 0, 2))                          # (T, B, 54)
    x_tm = jnp.pad(x_tm, ((0, 0), (0, 0), (0, IN_PAD - IN_DIM)))
    x_comb = jnp.concatenate([x_tm, x_tm[::-1]], axis=1)        # (T, 2B, 64)

    w0_t = jnp.pad(params["w0"], ((0, 0), (0, IN_PAD - IN_DIM))).T   # (64, 16)

    # Fold the 0.5 sigmoid input-scale into the i/f/o gate columns (g columns keep 1.0).
    colscale = jnp.concatenate([
        jnp.full((H,), 0.5, jnp.float32), jnp.full((H,), 0.5, jnp.float32),
        jnp.ones((H,), jnp.float32), jnp.full((H,), 0.5, jnp.float32)])   # (4H,)

    wih_w = jnp.concatenate([params["wih_f"].T * colscale,
                             params["wih_b"].T * colscale], axis=1)       # (16, 8H)
    # TODO(synk): when loading real torch.nn.LSTM weights, the per-direction bias must
    # be bias_ih_l0 + bias_hh_l0 (and the *_reverse pair); init_params carries one bias.
    b_f = params["b_f"][0] * colscale
    b_b = params["b_b"][0] * colscale
    b_comb = jnp.concatenate([jnp.broadcast_to(b_f, (B, G4)),
                              jnp.broadcast_to(b_b, (B, G4))], axis=0)    # (2B, 4H)

    whh_w = jnp.concatenate([params["whh_f"].T * colscale,
                             params["whh_b"].T * colscale],
                            axis=1).astype(jnp.bfloat16)                  # (H, 8H) bf16

    wfcn_f_t = params["wfcn"][:, :H].T                                    # (H, H)
    wfcn_b_t = params["wfcn"][:, H:].T

    vmem = pl.BlockSpec(memory_space=pltpu.MemorySpace.VMEM)
    out_flat = pl.pallas_call(
        ae_textencoder_kernel,
        out_shape=jax.ShapeDtypeStruct((T * B, H), jnp.float32),
        in_specs=[vmem] * 9,
        out_specs=vmem,
        scratch_shapes=[
            pltpu.VMEM((T, 2 * B, G4), jnp.float32),   # hoisted gate projections
            pltpu.VMEM((T, 2 * B, H), jnp.float32),    # combined hidden states
        ],
        # TODO(synk): at production T*B, set pltpu.CompilerParams(vmem_limit_bytes=...)
        # or chunk the hoisted projection over T (v7x has 64 MiB VMEM), and add a
        # batch grid axis with dimension_semantics=("parallel",) to use both v7x TCs.
    )(
        x_comb, w0_t, params["b0"], wih_w, b_comb, whh_w,
        wfcn_f_t, wfcn_b_t, params["bfcn"],
    )
    return jnp.transpose(out_flat.reshape(T, B, H), (1, 0, 2))            # (B, T, H)


ae_textencoder = jax.jit(_ae_textencoder_impl)


# ---------------- pure-JAX reference (mirrors torch semantics) ----------------
def reference(x, p):
    B, T, _ = x.shape
    H = TEXT_DIM
    y = jnp.tanh(jnp.einsum("btd,kd->btk", x, p["w0"]) + p["b0"])

    def step(wih, whh, b):
        def f(carry, y_t):
            h, c = carry
            g = y_t @ wih.T + h @ whh.T + b[0]
            i = jax.nn.sigmoid(g[:, 0 * H:1 * H])
            fg = jax.nn.sigmoid(g[:, 1 * H:2 * H])
            gg = jnp.tanh(g[:, 2 * H:3 * H])
            o = jax.nn.sigmoid(g[:, 3 * H:4 * H])
            c = fg * c + i * gg
            h = o * jnp.tanh(c)
            return (h, c), h
        return f

    h0 = jnp.zeros((B, H), jnp.float32)
    c0 = jnp.zeros((B, H), jnp.float32)
    y_tm = jnp.transpose(y, (1, 0, 2))                    # (T, B, 16)
    _, hf = lax.scan(step(p["wih_f"], p["whh_f"], p["b_f"]), (h0, c0), y_tm)
    _, hb = lax.scan(step(p["wih_b"], p["whh_b"], p["b_b"]), (h0, c0),
                     y_tm[::-1])
    hb = hb[::-1]
    hcat = jnp.concatenate([hf, hb], axis=-1)             # (T, B, 2H)
    out = jnp.tanh(jnp.einsum("tbd,kd->tbk", hcat, p["wfcn"]) + p["bfcn"])
    return jnp.transpose(out, (1, 0, 2))


def init_params(key):
    H = TEXT_DIM
    ks = jax.random.split(key, 11)

    def u(k, shape, fan_in):
        bound = 1.0 / jnp.sqrt(fan_in)
        return jax.random.uniform(k, shape, jnp.float32, -bound, bound)

    return {
        "w0":    u(ks[0], (FC0_DIM, IN_DIM), IN_DIM),
        "b0":    u(ks[1], (1, FC0_DIM), IN_DIM),
        "wih_f": u(ks[2], (4 * H, FC0_DIM), H),
        "whh_f": u(ks[3], (4 * H, H), H),
        "b_f":   u(ks[4], (1, 4 * H), H),
        "wih_b": u(ks[5], (4 * H, FC0_DIM), H),
        "whh_b": u(ks[6], (4 * H, H), H),
        "b_b":   u(ks[7], (1, 4 * H), H),
        "wfcn":  u(ks[8], (H, 2 * H), 2 * H),
        "bfcn":  u(ks[9], (1, H), 2 * H),
    }


if __name__ == "__main__":
    key = jax.random.PRNGKey(0)
    kx, kp = jax.random.split(key)
    B, T = 2, 8
    x = jax.random.normal(kx, (B, T, IN_DIM), jnp.float32)
    params = init_params(kp)

    out = jax.block_until_ready(ae_textencoder(x, params))
    ref = jax.block_until_ready(reference(x, params))

    assert out.shape == (B, T, TEXT_DIM), out.shape
    assert jnp.allclose(out, ref, atol=1e-2, rtol=1e-2), (
        float(jnp.max(jnp.abs(out - ref))))
    print("KERNEL_OK")
</pallas_src>

<mosaic_0001>
module attributes {stable_mosaic.version = 11 : i64} {
  func.func @ae_textencoder_kernel(%arg0: memref<8x4x64xf32, #tpu.memory_space<vmem>>, %arg1: memref<64x16xf32, #tpu.memory_space<vmem>>, %arg2: memref<1x16xf32, #tpu.memory_space<vmem>>, %arg3: memref<16x256xf32, #tpu.memory_space<vmem>>, %arg4: memref<4x128xf32, #tpu.memory_space<vmem>>, %arg5: memref<32x256xbf16, #tpu.memory_space<vmem>>, %arg6: memref<32x32xf32, #tpu.memory_space<vmem>>, %arg7: memref<32x32xf32, #tpu.memory_space<vmem>>, %arg8: memref<1x32xf32, #tpu.memory_space<vmem>>, %arg9: memref<16x32xf32, #tpu.memory_space<vmem>>, %arg10: memref<8x4x128xf32, #tpu.memory_space<vmem>>, %arg11: memref<8x4x32xf32, #tpu.memory_space<vmem>>) attributes {dimension_semantics = [], scalar_prefetch = 0 : i64, scratch_operands = 2 : i64, tpu.core_type = #tpu.core_type<tc>} {
    %0 = tpu.iota {dimensions = array<i32: 0>} : vector<4x1xi32>
    %c2_i32 = arith.constant 2 : i32
    %1 = vector.broadcast %c2_i32 : i32 to vector<4x1xi32>
    %2 = arith.cmpi slt, %0, %1 : vector<4x1xi32>
    %3 = tpu.iota {dimensions = array<i32: 1>} : vector<1x128xi32>
    %c64_i32 = arith.constant 64 : i32
    %4 = vector.broadcast %c64_i32 : i32 to vector<1x128xi32>
    %5 = arith.cmpi sge, %3, %4 : vector<1x128xi32>
    %c96_i32 = arith.constant 96 : i32
    %6 = vector.broadcast %c96_i32 : i32 to vector<1x128xi32>
    %7 = arith.cmpi slt, %3, %6 : vector<1x128xi32>
    %8 = arith.andi %5, %7 : vector<1x128xi1>
    %cst = arith.constant 1.000000e+00 : f32
    %cst_0 = arith.constant 5.000000e-01 : f32
    %9 = vector.broadcast %cst : f32 to vector<1x128xf32>
    %10 = vector.broadcast %cst_0 : f32 to vector<1x128xf32>
    %11 = arith.select %8, %9, %10 : vector<1x128xi1>, vector<1x128xf32>
    %cst_1 = arith.constant 0.000000e+00 : f32
    %cst_2 = arith.constant 5.000000e-01 : f32
    %12 = vector.broadcast %cst_1 : f32 to vector<1x128xf32>
    %13 = vector.broadcast %cst_2 : f32 to vector<1x128xf32>
    %14 = arith.select %8, %12, %13 : vector<1x128xi1>, vector<1x128xf32>
    %c0 = arith.constant 0 : index
    %c0_3 = arith.constant 0 : index
    %c0_4 = arith.constant 0 : index
    %15 = vector.load %arg0[%c0, %c0_3, %c0_4] : memref<8x4x64xf32, #tpu.memory_space<vmem>>, vector<8x4x64xf32>
    %16 = vector.shape_cast %15 : vector<8x4x64xf32> to vector<32x64xf32>
    %c0_5 = arith.constant 0 : index
    %c0_6 = arith.constant 0 : index
    %17 = vector.load %arg1[%c0_5, %c0_6] : memref<64x16xf32, #tpu.memory_space<vmem>>, vector<64x16xf32>
    %cst_7 = arith.constant dense<0.000000e+00> : vector<32x16xf32>
    %18 = tpu.matmul %16, %17, %cst_7 {dimension_numbers = #tpu.dot_dimension_numbers<[1], [0], [0], [1], [0, 0, 1, 1], [], []>} : vector<32x64xf32>, vector<64x16xf32>, vector<32x16xf32> -> vector<32x16xf32>
    %c0_8 = arith.constant 0 : index
    %c0_9 = arith.constant 0 : index
    %19 = vector.load %arg2[%c0_8, %c0_9] : memref<1x16xf32, #tpu.memory_space<vmem>>, vector<1x16xf32>
    %20 = vector.broadcast %19 : vector<1x16xf32> to vector<32x16xf32>
    %21 = arith.addf %18, %20 : vector<32x16xf32>
    %22 = math.tanh %21 : vector<32x16xf32>
    %c0_10 = arith.constant 0 : index
    %c0_11 = arith.constant 0 : index
    %23 = vector.load %arg3[%c0_10, %c0_11] : memref<16x256xf32, #tpu.memory_space<vmem>>, vector<16x256xf32>
    %cst_12 = arith.constant dense<0.000000e+00> : vector<32x256xf32>
    %24 = tpu.matmul %22, %23, %cst_12 {dimension_numbers = #tpu.dot_dimension_numbers<[1], [0], [0], [1], [0, 0, 1, 1], [], []>} : vector<32x16xf32>, vector<16x256xf32>, vector<32x256xf32> -> vector<32x256xf32>
    %25 = vector.shape_cast %24 : vector<32x256xf32> to vector<8x4x256xf32>
    %26 = vector.shape_cast %2 : vector<4x1xi1> to vector<1x4x1xi1>
    %27 = vector.extract_strided_slice %25 {offsets = [0, 0, 0], sizes = [8, 4, 128], strides = [1, 1, 1]} : vector<8x4x256xf32> to vector<8x4x128xf32>
    %28 = vector.extract_strided_slice %25 {offsets = [0, 0, 128], sizes = [8, 4, 128], strides = [1, 1, 1]} : vector<8x4x256xf32> to vector<8x4x128xf32>
    %29 = vector.shape_cast %26 : vector<1x4x1xi1> to vector<1x4x1xi1>
    %30 = vector.broadcast %29 : vector<1x4x1xi1> to vector<8x4x128xi1>
    %31 = arith.select %30, %27, %28 : vector<8x4x128xi1>, vector<8x4x128xf32>
    %c0_13 = arith.constant 0 : index
    %c0_14 = arith.constant 0 : index
    %32 = vector.load %arg4[%c0_13, %c0_14] : memref<4x128xf32, #tpu.memory_space<vmem>>, vector<4x128xf32>
    %33 = vector.shape_cast %32 : vector<4x128xf32> to vector<1x4x128xf32>
    %34 = vector.broadcast %33 : vector<1x4x128xf32> to vector<8x4x128xf32>
    %35 = arith.addf %31, %34 : vector<8x4x128xf32>
    %c0_15 = arith.constant 0 : index
    %c0_16 = arith.constant 0 : index
    %c0_17 = arith.constant 0 : index
    %36 = vector.load %arg10[%c0_15, %c0_16, %c0_17] : memref<8x4x128xf32, #tpu.memory_space<vmem>>, vector<8x4x128xf32>
    tpu.vector_store %arg10[%c0_15, %c0_16, %c0_17], %35 {strides = array<i32>} : memref<8x4x128xf32, #tpu.memory_space<vmem>>, vector<8x4x128xf32>,
    %c0_18 = arith.constant 0 : index
    %c0_19 = arith.constant 0 : index
    %37 = vector.load %arg5[%c0_18, %c0_19] : memref<32x256xbf16, #tpu.memory_space<vmem>>, vector<32x256xbf16>
    %cst_20 = arith.constant 0.000000e+00 : bf16
    %38 = vector.broadcast %cst_20 : bf16 to vector<4x32xbf16>
    %cst_21 = arith.constant 0.000000e+00 : f32
    %39 = vector.broadcast %cst_21 : f32 to vector<4x32xf32>
    %c0_i32 = arith.constant 0 : i32
    %cst_22 = arith.constant dense<0.000000e+00> : vector<4x256xf32>
    %40 = tpu.matmul %38, %37, %cst_22 {dimension_numbers = #tpu.dot_dimension_numbers<[1], [0], [0], [1], [0, 0, 1, 1], [], []>} : vector<4x32xbf16>, vector<32x256xbf16>, vector<4x256xf32> -> vector<4x256xf32>
    %41 = arith.index_cast %c0_i32 : i32 to index
    %c0_23 = arith.constant 0 : index
    %c0_24 = arith.constant 0 : index
    %42 = vector.load %arg10[%41, %c0_23, %c0_24] : memref<8x4x128xf32, #tpu.memory_space<vmem>>, vector<1x4x128xf32>
    %43 = vector.shape_cast %42 : vector<1x4x128xf32> to vector<4x128xf32>
    %44 = vector.extract_strided_slice %40 {offsets = [0, 0], sizes = [4, 128], strides = [1, 1]} : vector<4x256xf32> to vector<4x128xf32>
    %45 = vector.extract_strided_slice %40 {offsets = [0, 128], sizes = [4, 128], strides = [1, 1]} : vector<4x256xf32> to vector<4x128xf32>
    %46 = vector.shape_cast %2 : vector<4x1xi1> to vector<4x1xi1>
    %47 = vector.broadcast %46 : vector<4x1xi1> to vector<4x128xi1>
    %48 = arith.select %47, %44, %45 : vector<4x128xi1>, vector<4x128xf32>
    %49 = arith.addf %43, %48 : vector<4x128xf32>
    %50 = math.tanh %49 : vector<4x128xf32>
    %51 = vector.broadcast %11 : vector<1x128xf32> to vector<4x128xf32>
    %52 = arith.mulf %50, %51 : vector<4x128xf32>
    %53 = vector.broadcast %14 : vector<1x128xf32> to vector<4x128xf32>
    %54 = arith.addf %52, %53 : vector<4x128xf32>
    %55 = vector.extract_strided_slice %54 {offsets = [0, 0], sizes = [4, 32], strides = [1, 1]} : vector<4x128xf32> to vector<4x32xf32>
    %56 = vector.extract_strided_slice %54 {offsets = [0, 32], sizes = [4, 32], strides = [1, 1]} : vector<4x128xf32> to vector<4x32xf32>
    %57 = vector.extract_strided_slice %54 {offsets = [0, 64], sizes = [4, 32], strides = [1, 1]} : vector<4x128xf32> to vector<4x32xf32>
    %58 = vector.extract_strided_slice %54 {offsets = [0, 96], sizes = [4, 32], strides = [1, 1]} : vector<4x128xf32> to vector<4x32xf32>
    %59 = arith.mulf %56, %39 : vector<4x32xf32>
    %60 = arith.mulf %55, %57 : vector<4x32xf32>
    %61 = arith.addf %59, %60 : vector<4x32xf32>
    %62 = math.tanh %61 : vector<4x32xf32>
    %63 = arith.mulf %58, %62 : vector<4x32xf32>
    %64 = arith.index_cast %c0_i32 : i32 to index
    %c0_25 = arith.constant 0 : index
    %c0_26 = arith.constant 0 : index
    %65 = vector.load %arg11[%64, %c0_25, %c0_26] : memref<8x4x32xf32, #tpu.memory_space<vmem>>, vector<1x4x32xf32>
    %66 = vector.shape_cast %65 : vector<1x4x32xf32> to vector<4x32xf32>
    %67 = vector.shape_cast %63 : vector<4x32xf32> to vector<1x4x32xf32>
    tpu.vector_store %arg11[%64, %c0_25, %c0_26], %67 {strides = array<i32>} : memref<8x4x32xf32, #tpu.memory_space<vmem>>, vector<1x4x32xf32>,
    %68 = arith.truncf %63 : vector<4x32xf32> to vector<4x32xbf16>
    %c1_i32 = arith.constant 1 : i32
    %cst_27 = arith.constant dense<0.000000e+00> : vector<4x256xf32>
    %69 = tpu.matmul %68, %37, %cst_27 {dimension_numbers = #tpu.dot_dimension_numbers<[1], [0], [0], [1], [0, 0, 1, 1], [], []>} : vector<4x32xbf16>, vector<32x256xbf16>, vector<4x256xf32> -> vector<4x256xf32>
    %70 = arith.index_cast %c1_i32 : i32 to index
    %c0_28 = arith.constant 0 : index
    %c0_29 = arith.constant 0 : index
    %71 = vector.load %arg10[%70, %c0_28, %c0_29] : memref<8x4x128xf32, #tpu.memory_space<vmem>>, vector<1x4x128xf32>
    %72 = vector.shape_cast %71 : vector<1x4x128xf32> to vector<4x128xf32>
    %73 = vector.extract_strided_slice %69 {offsets = [0, 0], sizes = [4, 128], strides = [1, 1]} : vector<4x256xf32> to vector<4x128xf32>
    %74 = vector.extract_strided_slice %69 {offsets = [0, 128], sizes = [4, 128], strides = [1, 1]} : vector<4x256xf32> to vector<4x128xf32>
    %75 = vector.shape_cast %2 : vector<4x1xi1> to vector<4x1xi1>
    %76 = vector.broadcast %75 : vector<4x1xi1> to vector<4x128xi1>
    %77 = arith.select %76, %73, %74 : vector<4x128xi1>, vector<4x128xf32>
    %78 = arith.addf %72, %77 : vector<4x128xf32>
    %79 = math.tanh %78 : vector<4x128xf32>
    %80 = vector.broadcast %11 : vector<1x128xf32> to vector<4x128xf32>
    %81 = arith.mulf %79, %80 : vector<4x128xf32>
    %82 = vector.broadcast %14 : vector<1x128xf32> to vector<4x128xf32>
    %83 = arith.addf %81, %82 : vector<4x128xf32>
    %84 = vector.extract_strided_slice %83 {offsets = [0, 0], sizes = [4, 32], strides = [1, 1]} : vector<4x128xf32> to vector<4x32xf32>
    %85 = vector.extract_strided_slice %83 {offsets = [0, 32], sizes = [4, 32], strides = [1, 1]} : vector<4x128xf32> to vector<4x32xf32>
    %86 = vector.extract_strided_slice %83 {offsets = [0, 64], sizes = [4, 32], strides = [1, 1]} : vector<4x128xf32> to vector<4x32xf32>
    %87 = vector.extract_strided_slice %83 {offsets = [0, 96], sizes = [4, 32], strides = [1, 1]} : vector<4x128xf32> to vector<4x32xf32>
    %88 = arith.mulf %85, %61 : vector<4x32xf32>
    %89 = arith.mulf %84, %86 : vector<4x32xf32>
    %90 = arith.addf %88, %89 : vector<4x32xf32>
    %91 = math.tanh %90 : vector<4x32xf32>
    %92 = arith.mulf %87, %91 : vector<4x32xf32>
    %93 = arith.index_cast %c1_i32 : i32 to index
    %c0_30 = arith.constant 0 : index
    %c0_31 = arith.constant 0 : index
    %94 = vector.load %arg11[%93, %c0_30, %c0_31] : memref<8x4x32xf32, #tpu.memory_space<vmem>>, vector<1x4x32xf32>
    %95 = vector.shape_cast %94 : vector<1x4x32xf32> to vector<4x32xf32>
    %96 = vector.shape_cast %92 : vector<4x32xf32> to vector<1x4x32xf32>
    tpu.vector_store %arg11[%93, %c0_30, %c0_31], %96 {strides = array<i32>} : memref<8x4x32xf32, #tpu.memory_space<vmem>>, vector<1x4x32xf32>,
    %97 = arith.truncf %92 : vector<4x32xf32> to vector<4x32xbf16>
    %c2_i32_32 = arith.constant 2 : i32
    %cst_33 = arith.constant dense<0.000000e+00> : vector<4x256xf32>
    %98 = tpu.matmul %97, %37, %cst_33 {dimension_numbers = #tpu.dot_dimension_numbers<[1], [0], [0], [1], [0, 0, 1, 1], [], []>} : vector<4x32xbf16>, vector<32x256xbf16>, vector<4x256xf32> -> vector<4x256xf32>
    %99 = arith.index_cast %c2_i32_32 : i32 to index
    %c0_34 = arith.constant 0 : index
    %c0_35 = arith.constant 0 : index
    %100 = vector.load %arg10[%99, %c0_34, %c0_35] : memref<8x4x128xf32, #tpu.memory_space<vmem>>, vector<1x4x128xf32>
    %101 = vector.shape_cast %100 : vector<1x4x128xf32> to vector<4x128xf32>
    %102 = vector.extract_strided_slice %98 {offsets = [0, 0], sizes = [4, 128], strides = [1, 1]} : vector<4x256xf32> to vector<4x128xf32>
    %103 = vector.extract_strided_slice %98 {offsets = [0, 128], sizes = [4, 128], strides = [1, 1]} : vector<4x256xf32> to vector<4x128xf32>
    %104 = vector.shape_cast %2 : vector<4x1xi1> to vector<4x1xi1>
    %105 = vector.broadcast %104 : vector<4x1xi1> to vector<4x128xi1>
    %106 = arith.select %105, %102, %103 : vector<4x128xi1>, vector<4x128xf32>
    %107 = arith.addf %101, %106 : vector<4x128xf32>
    %108 = math.tanh %107 : vector<4x128xf32>
    %109 = vector.broadcast %11 : vector<1x128xf32> to vector<4x128xf32>
    %110 = arith.mulf %108, %109 : vector<4x128xf32>
    %111 = vector.broadcast %14 : vector<1x128xf32> to vector<4x128xf32>
    %112 = arith.addf %110, %111 : vector<4x128xf32>
    %113 = vector.extract_strided_slice %112 {offsets = [0, 0], sizes = [4, 32], strides = [1, 1]} : vector<4x128xf32> to vector<4x32xf32>
    %114 = vector.extract_strided_slice %112 {offsets = [0, 32], sizes = [4, 32], strides = [1, 1]} : vector<4x128xf32> to vector<4x32xf32>
    %115 = vector.extract_strided_slice %112 {offsets = [0, 64], sizes = [4, 32], strides = [1, 1]} : vector<4x128xf32> to vector<4x32xf32>
    %116 = vector.extract_strided_slice %112 {offsets = [0, 96], sizes = [4, 32], strides = [1, 1]} : vector<4x128xf32> to vector<4x32xf32>
    %117 = arith.mulf %114, %90 : vector<4x32xf32>
    %118 = arith.mulf %113, %115 : vector<4x32xf32>
    %119 = arith.addf %117, %118 : vector<4x32xf32>
    %120 = math.tanh %119 : vector<4x32xf32>
    %121 = arith.mulf %116, %120 : vector<4x32xf32>
    %122 = arith.index_cast %c2_i32_32 : i32 to index
    %c0_36 = arith.constant 0 : index
    %c0_37 = arith.constant 0 : index
    %123 = vector.load %arg11[%122, %c0_36, %c0_37] : memref<8x4x32xf32, #tpu.memory_space<vmem>>, vector<1x4x32xf32>
    %124 = vector.shape_cast %123 : vector<1x4x32xf32> to vector<4x32xf32>
    %125 = vector.shape_cast %121 : vector<4x32xf32> to vector<1x4x32xf32>
    tpu.vector_store %arg11[%122, %c0_36, %c0_37], %125 {strides = array<i32>} : memref<8x4x32xf32, #tpu.memory_space<vmem>>, vector<1x4x32xf32>,
    %126 = arith.truncf %121 : vector<4x32xf32> to vector<4x32xbf16>
    %c3_i32 = arith.constant 3 : i32
    %cst_38 = arith.constant dense<0.000000e+00> : vector<4x256xf32>
    %127 = tpu.matmul %126, %37, %cst_38 {dimension_numbers = #tpu.dot_dimension_numbers<[1], [0], [0], [1], [0, 0, 1, 1], [], []>} : vector<4x32xbf16>, vector<32x256xbf16>, vector<4x256xf32> -> vector<4x256xf32>
    %128 = arith.index_cast %c3_i32 : i32 to index
    %c0_39 = arith.constant 0 : index
    %c0_40 = arith.constant 0 : index
    %129 = vector.load %arg10[%128, %c0_39, %c0_40] : memref<8x4x128xf32, #tpu.memory_space<vmem>>, vector<1x4x128xf32>
    %130 = vector.shape_cast %129 : vector<1x4x128xf32> to vector<4x128xf32>
    %131 = vector.extract_strided_slice %127 {offsets = [0, 0], sizes = [4, 128], strides = [1, 1]} : vector<4x256xf32> to vector<4x128xf32>
    %132 = vector.extract_strided_slice %127 {offsets = [0, 128], sizes = [4, 128], strides = [1, 1]} : vector<4x256xf32> to vector<4x128xf32>
    %133 = vector.shape_cast %2 : vector<4x1xi1> to vector<4x1xi1>
    %134 = vector.broadcast %133 : vector<4x1xi1> to vector<4x128xi1>
    %135 = arith.select %134, %131, %132 : vector<4x128xi1>, vector<4x128xf32>
    %136 = arith.addf %130, %135 : vector<4x128xf32>
    %137 = math.tanh %136 : vector<4x128xf32>
    %138 = vector.broadcast %11 : vector<1x128xf32> to vector<4x128xf32>
    %139 = arith.mulf %137, %138 : vector<4x128xf32>
    %140 = vector.broadcast %14 : vector<1x128xf32> to vector<4x128xf32>
    %141 = arith.addf %139, %140 : vector<4x128xf32>
    %142 = vector.extract_strided_slice %141 {offsets = [0, 0], sizes = [4, 32], strides = [1, 1]} : vector<4x128xf32> to vector<4x32xf32>
    %143 = vector.extract_strided_slice %141 {offsets = [0, 32], sizes = [4, 32], strides = [1, 1]} : vector<4x128xf32> to vector<4x32xf32>
    %144 = vector.extract_strided_slice %141 {offsets = [0, 64], sizes = [4, 32], strides = [1, 1]} : vector<4x128xf32> to vector<4x32xf32>
    %145 = vector.extract_strided_slice %141 {offsets = [0, 96], sizes = [4, 32], strides = [1, 1]} : vector<4x128xf32> to vector<4x32xf32>
    %146 = arith.mulf %143, %119 : vector<4x32xf32>
    %147 = arith.mulf %142, %144 : vector<4x32xf32>
    %148 = arith.addf %146, %147 : vector<4x32xf32>
    %149 = math.tanh %148 : vector<4x32xf32>
    %150 = arith.mulf %145, %149 : vector<4x32xf32>
    %151 = arith.index_cast %c3_i32 : i32 to index
    %c0_41 = arith.constant 0 : index
    %c0_42 = arith.constant 0 : index
    %152 = vector.load %arg11[%151, %c0_41, %c0_42] : memref<8x4x32xf32, #tpu.memory_space<vmem>>, vector<1x4x32xf32>
    %153 = vector.shape_cast %152 : vector<1x4x32xf32> to vector<4x32xf32>
    %154 = vector.shape_cast %150 : vector<4x32xf32> to vector<1x4x32xf32>
    tpu.vector_store %arg11[%151, %c0_41, %c0_42], %154 {strides = array<i32>} : memref<8x4x32xf32, #tpu.memory_space<vmem>>, vector<1x4x32xf32>,
    %155 = arith.truncf %150 : vector<4x32xf32> to vector<4x32xbf16>
    %c4_i32 = arith.constant 4 : i32
    %cst_43 = arith.constant dense<0.000000e+00> : vector<4x256xf32>
    %156 = tpu.matmul %155, %37, %cst_43 {dimension_numbers = #tpu.dot_dimension_numbers<[1], [0], [0], [1], [0, 0, 1, 1], [], []>} : vector<4x32xbf16>, vector<32x256xbf16>, vector<4x256xf32> -> vector<4x256xf32>
    %157 = arith.index_cast %c4_i32 : i32 to index
    %c0_44 = arith.constant 0 : index
    %c0_45 = arith.constant 0 : index
    %158 = vector.load %arg10[%157, %c0_44, %c0_45] : memref<8x4x128xf32, #tpu.memory_space<vmem>>, vector<1x4x128xf32>
    %159 = vector.shape_cast %158 : vector<1x4x128xf32> to vector<4x128xf32>
    %160 = vector.extract_strided_slice %156 {offsets = [0, 0], sizes = [4, 128], strides = [1, 1]} : vector<4x256xf32> to vector<4x128xf32>
    %161 = vector.extract_strided_slice %156 {offsets = [0, 128], sizes = [4, 128], strides = [1, 1]} : vector<4x256xf32> to vector<4x128xf32>
    %162 = vector.shape_cast %2 : vector<4x1xi1> to vector<4x1xi1>
    %163 = vector.broadcast %162 : vector<4x1xi1> to vector<4x128xi1>
    %164 = arith.select %163, %160, %161 : vector<4x128xi1>, vector<4x128xf32>
    %165 = arith.addf %159, %164 : vector<4x128xf32>
    %166 = math.tanh %165 : vector<4x128xf32>
    %167 = vector.broadcast %11 : vector<1x128xf32> to vector<4x128xf32>
    %168 = arith.mulf %166, %167 : vector<4x128xf32>
    %169 = vector.broadcast %14 : vector<1x128xf32> to vector<4x128xf32>
    %170 = arith.addf %168, %169 : vector<4x128xf32>
    %171 = vector.extract_strided_slice %170 {offsets = [0, 0], sizes = [4, 32], strides = [1, 1]} : vector<4x128xf32> to vector<4x32xf32>
    %172 = vector.extract_strided_slice %170 {offsets = [0, 32], sizes = [4, 32], strides = [1, 1]} : vector<4x128xf32> to vector<4x32xf32>
    %173 = vector.extract_strided_slice %170 {offsets = [0, 64], sizes = [4, 32], strides = [1, 1]} : vector<4x128xf32> to vector<4x32xf32>
    %174 = vector.extract_strided_slice %170 {offsets = [0, 96], sizes = [4, 32], strides = [1, 1]} : vector<4x128xf32> to vector<4x32xf32>
    %175 = arith.mulf %172, %148 : vector<4x32xf32>
    %176 = arith.mulf %171, %173 : vector<4x32xf32>
    %177 = arith.addf %175, %176 : vector<4x32xf32>
    %178 = math.tanh %177 : vector<4x32xf32>
    %179 = arith.mulf %174, %178 : vector<4x32xf32>
    %180 = arith.index_cast %c4_i32 : i32 to index
    %c0_46 = arith.constant 0 : index
    %c0_47 = arith.constant 0 : index
    %181 = vector.load %arg11[%180, %c0_46, %c0_47] : memref<8x4x32xf32, #tpu.memory_space<vmem>>, vector<1x4x32xf32>
    %182 = vector.shape_cast %181 : vector<1x4x32xf32> to vector<4x32xf32>
    %183 = vector.shape_cast %179 : vector<4x32xf32> to vector<1x4x32xf32>
    tpu.vector_store %arg11[%180, %c0_46, %c0_47], %183 {strides = array<i32>} : memref<8x4x32xf32, #tpu.memory_space<vmem>>, vector<1x4x32xf32>,
    %184 = arith.truncf %179 : vector<4x32xf32> to vector<4x32xbf16>
    %c5_i32 = arith.constant 5 : i32
    %cst_48 = arith.constant dense<0.000000e+00> : vector<4x256xf32>
    %185 = tpu.matmul %184, %37, %cst_48 {dimension_numbers = #tpu.dot_dimension_numbers<[1], [0], [0], [1], [0, 0, 1, 1], [], []>} : vector<4x32xbf16>, vector<32x256xbf16>, vector<4x256xf32> -> vector<4x256xf32>
    %186 = arith.index_cast %c5_i32 : i32 to index
    %c0_49 = arith.constant 0 : index
    %c0_50 = arith.constant 0 : index
    %187 = vector.load %arg10[%186, %c0_49, %c0_50] : memref<8x4x128xf32, #tpu.memory_space<vmem>>, vector<1x4x128xf32>
    %188 = vector.shape_cast %187 : vector<1x4x128xf32> to vector<4x128xf32>
    %189 = vector.extract_strided_slice %185 {offsets = [0, 0], sizes = [4, 128], strides = [1, 1]} : vector<4x256xf32> to vector<4x128xf32>
    %190 = vector.extract_strided_slice %185 {offsets = [0, 128], sizes = [4, 128], strides = [1, 1]} : vector<4x256xf32> to vector<4x128xf32>
    %191 = vector.shape_cast %2 : vector<4x1xi1> to vector<4x1xi1>
    %192 = vector.broadcast %191 : vector<4x1xi1> to vector<4x128xi1>
    %193 = arith.select %192, %189, %190 : vector<4x128xi1>, vector<4x128xf32>
    %194 = arith.addf %188, %193 : vector<4x128xf32>
    %195 = math.tanh %194 : vector<4x128xf32>
    %196 = vector.broadcast %11 : vector<1x128xf32> to vector<4x128xf32>
    %197 = arith.mulf %195, %196 : vector<4x128xf32>
    %198 = vector.broadcast %14 : vector<1x128xf32> to vector<4x128xf32>
    %199 = arith.addf %197, %198 : vector<4x128xf32>
    %200 = vector.extract_strided_slice %199 {offsets = [0, 0], sizes = [4, 32], strides = [1, 1]} : vector<4x128xf32> to vector<4x32xf32>
    %201 = vector.extract_strided_slice %199 {offsets = [0, 32], sizes = [4, 32], strides = [1, 1]} : vector<4x128xf32> to vector<4x32xf32>
    %202 = vector.extract_strided_slice %199 {offsets = [0, 64], sizes = [4, 32], strides = [1, 1]} : vector<4x128xf32> to vector<4x32xf32>
    %203 = vector.extract_strided_slice %199 {offsets = [0, 96], sizes = [4, 32], strides = [1, 1]} : vector<4x128xf32> to vector<4x32xf32>
    %204 = arith.mulf %201, %177 : vector<4x32xf32>
    %205 = arith.mulf %200, %202 : vector<4x32xf32>
    %206 = arith.addf %204, %205 : vector<4x32xf32>
    %207 = math.tanh %206 : vector<4x32xf32>
    %208 = arith.mulf %203, %207 : vector<4x32xf32>
    %209 = arith.index_cast %c5_i32 : i32 to index
    %c0_51 = arith.constant 0 : index
    %c0_52 = arith.constant 0 : index
    %210 = vector.load %arg11[%209, %c0_51, %c0_52] : memref<8x4x32xf32, #tpu.memory_space<vmem>>, vector<1x4x32xf32>
    %211 = vector.shape_cast %210 : vector<1x4x32xf32> to vector<4x32xf32>
    %212 = vector.shape_cast %208 : vector<4x32xf32> to vector<1x4x32xf32>
    tpu.vector_store %arg11[%209, %c0_51, %c0_52], %212 {strides = array<i32>} : memref<8x4x32xf32, #tpu.memory_space<vmem>>, vector<1x4x32xf32>,
    %213 = arith.truncf %208 : vector<4x32xf32> to vector<4x32xbf16>
    %c6_i32 = arith.constant 6 : i32
    %cst_53 = arith.constant dense<0.000000e+00> : vector<4x256xf32>
    %214 = tpu.matmul %213, %37, %cst_53 {dimension_numbers = #tpu.dot_dimension_numbers<[1], [0], [0], [1], [0, 0, 1, 1], [], []>} : vector<4x32xbf16>, vector<32x256xbf16>, vector<4x256xf32> -> vector<4x256xf32>
    %215 = arith.index_cast %c6_i32 : i32 to index
    %c0_54 = arith.constant 0 : index
    %c0_55 = arith.constant 0 : index
    %216 = vector.load %arg10[%215, %c0_54, %c0_55] : memref<8x4x128xf32, #tpu.memory_space<vmem>>, vector<1x4x128xf32>
    %217 = vector.shape_cast %216 : vector<1x4x128xf32> to vector<4x128xf32>
    %218 = vector.extract_strided_slice %214 {offsets = [0, 0], sizes = [4, 128], strides = [1, 1]} : vector<4x256xf32> to vector<4x128xf32>
    %219 = vector.extract_strided_slice %214 {offsets = [0, 128], sizes = [4, 128], strides = [1, 1]} : vector<4x256xf32> to vector<4x128xf32>
    %220 = vector.shape_cast %2 : vector<4x1xi1> to vector<4x1xi1>
    %221 = vector.broadcast %220 : vector<4x1xi1> to vector<4x128xi1>
    %222 = arith.select %221, %218, %219 : vector<4x128xi1>, vector<4x128xf32>
    %223 = arith.addf %217, %222 : vector<4x128xf32>
    %224 = math.tanh %223 : vector<4x128xf32>
    %225 = vector.broadcast %11 : vector<1x128xf32> to vector<4x128xf32>
    %226 = arith.mulf %224, %225 : vector<4x128xf32>
    %227 = vector.broadcast %14 : vector<1x128xf32> to vector<4x128xf32>
    %228 = arith.addf %226, %227 : vector<4x128xf32>
    %229 = vector.extract_strided_slice %228 {offsets = [0, 0], sizes = [4, 32], strides = [1, 1]} : vector<4x128xf32> to vector<4x32xf32>
    %230 = vector.extract_strided_slice %228 {offsets = [0, 32], sizes = [4, 32], strides = [1, 1]} : vector<4x128xf32> to vector<4x32xf32>
    %231 = vector.extract_strided_slice %228 {offsets = [0, 64], sizes = [4, 32], strides = [1, 1]} : vector<4x128xf32> to vector<4x32xf32>
    %232 = vector.extract_strided_slice %228 {offsets = [0, 96], sizes = [4, 32], strides = [1, 1]} : vector<4x128xf32> to vector<4x32xf32>
    %233 = arith.mulf %230, %206 : vector<4x32xf32>
    %234 = arith.mulf %229, %231 : vector<4x32xf32>
    %235 = arith.addf %233, %234 : vector<4x32xf32>
    %236 = math.tanh %235 : vector<4x32xf32>
    %237 = arith.mulf %232, %236 : vector<4x32xf32>
    %238 = arith.index_cast %c6_i32 : i32 to index
    %c0_56 = arith.constant 0 : index
    %c0_57 = arith.constant 0 : index
    %239 = vector.load %arg11[%238, %c0_56, %c0_57] : memref<8x4x32xf32, #tpu.memory_space<vmem>>, vector<1x4x32xf32>
    %240 = vector.shape_cast %239 : vector<1x4x32xf32> to vector<4x32xf32>
    %241 = vector.shape_cast %237 : vector<4x32xf32> to vector<1x4x32xf32>
    tpu.vector_store %arg11[%238, %c0_56, %c0_57], %241 {strides = array<i32>} : memref<8x4x32xf32, #tpu.memory_space<vmem>>, vector<1x4x32xf32>,
    %242 = arith.truncf %237 : vector<4x32xf32> to vector<4x32xbf16>
    %c7_i32 = arith.constant 7 : i32
    %cst_58 = arith.constant dense<0.000000e+00> : vector<4x256xf32>
    %243 = tpu.matmul %242, %37, %cst_58 {dimension_numbers = #tpu.dot_dimension_numbers<[1], [0], [0], [1], [0, 0, 1, 1], [], []>} : vector<4x32xbf16>, vector<32x256xbf16>, vector<4x256xf32> -> vector<4x256xf32>
    %244 = arith.index_cast %c7_i32 : i32 to index
    %c0_59 = arith.constant 0 : index
    %c0_60 = arith.constant 0 : index
    %245 = vector.load %arg10[%244, %c0_59, %c0_60] : memref<8x4x128xf32, #tpu.memory_space<vmem>>, vector<1x4x128xf32>
    %246 = vector.shape_cast %245 : vector<1x4x128xf32> to vector<4x128xf32>
    %247 = vector.extract_strided_slice %243 {offsets = [0, 0], sizes = [4, 128], strides = [1, 1]} : vector<4x256xf32> to vector<4x128xf32>
    %248 = vector.extract_strided_slice %243 {offsets = [0, 128], sizes = [4, 128], strides = [1, 1]} : vector<4x256xf32> to vector<4x128xf32>
    %249 = vector.shape_cast %2 : vector<4x1xi1> to vector<4x1xi1>
    %250 = vector.broadcast %249 : vector<4x1xi1> to vector<4x128xi1>
    %251 = arith.select %250, %247, %248 : vector<4x128xi1>, vector<4x128xf32>
    %252 = arith.addf %246, %251 : vector<4x128xf32>
    %253 = math.tanh %252 : vector<4x128xf32>
    %254 = vector.broadcast %11 : vector<1x128xf32> to vector<4x128xf32>
    %255 = arith.mulf %253, %254 : vector<4x128xf32>
    %256 = vector.broadcast %14 : vector<1x128xf32> to vector<4x128xf32>
    %257 = arith.addf %255, %256 : vector<4x128xf32>
    %258 = vector.extract_strided_slice %257 {offsets = [0, 0], sizes = [4, 32], strides = [1, 1]} : vector<4x128xf32> to vector<4x32xf32>
    %259 = vector.extract_strided_slice %257 {offsets = [0, 32], sizes = [4, 32], strides = [1, 1]} : vector<4x128xf32> to vector<4x32xf32>
    %260 = vector.extract_strided_slice %257 {offsets = [0, 64], sizes = [4, 32], strides = [1, 1]} : vector<4x128xf32> to vector<4x32xf32>
    %261 = vector.extract_strided_slice %257 {offsets = [0, 96], sizes = [4, 32], strides = [1, 1]} : vector<4x128xf32> to vector<4x32xf32>
    %262 = arith.mulf %259, %235 : vector<4x32xf32>
    %263 = arith.mulf %258, %260 : vector<4x32xf32>
    %264 = arith.addf %262, %263 : vector<4x32xf32>
    %265 = math.tanh %264 : vector<4x32xf32>
    %266 = arith.mulf %261, %265 : vector<4x32xf32>
    %267 = arith.index_cast %c7_i32 : i32 to index
    %c0_61 = arith.constant 0 : index
    %c0_62 = arith.constant 0 : index
    %268 = vector.load %arg11[%267, %c0_61, %c0_62] : memref<8x4x32xf32, #tpu.memory_space<vmem>>, vector<1x4x32xf32>
    %269 = vector.shape_cast %268 : vector<1x4x32xf32> to vector<4x32xf32>
    %270 = vector.shape_cast %266 : vector<4x32xf32> to vector<1x4x32xf32>
    tpu.vector_store %arg11[%267, %c0_61, %c0_62], %270 {strides = array<i32>} : memref<8x4x32xf32, #tpu.memory_space<vmem>>, vector<1x4x32xf32>,
    %271 = arith.truncf %266 : vector<4x32xf32> to vector<4x32xbf16>
    %c8_i32 = arith.constant 8 : i32
    %c0_63 = arith.constant 0 : index
    %c0_64 = arith.constant 0 : index
    %c0_65 = arith.constant 0 : index
    %272 = vector.load %arg11[%c0_63, %c0_64, %c0_65] : memref<8x4x32xf32, #tpu.memory_space<vmem>>, vector<8x4x32xf32>
    %273 = vector.extract_strided_slice %272 {offsets = [0, 0, 0], sizes = [8, 2, 32], strides = [1, 1, 1]} : vector<8x4x32xf32> to vector<8x2x32xf32>
    %274 = vector.shape_cast %273 : vector<8x2x32xf32> to vector<16x32xf32>
    %275 = vector.extract_strided_slice %272 {offsets = [7, 2, 0], sizes = [1, 2, 32], strides = [1, 1, 1]} : vector<8x4x32xf32> to vector<1x2x32xf32>
    %276 = vector.shape_cast %275 : vector<1x2x32xf32> to vector<2x32xf32>
    %277 = vector.extract_strided_slice %272 {offsets = [6, 2, 0], sizes = [1, 2, 32], strides = [1, 1, 1]} : vector<8x4x32xf32> to vector<1x2x32xf32>
    %278 = vector.shape_cast %277 : vector<1x2x32xf32> to vector<2x32xf32>
    %279 = vector.extract_strided_slice %272 {offsets = [5, 2, 0], sizes = [1, 2, 32], strides = [1, 1, 1]} : vector<8x4x32xf32> to vector<1x2x32xf32>
    %280 = vector.shape_cast %279 : vector<1x2x32xf32> to vector<2x32xf32>
    %281 = vector.extract_strided_slice %272 {offsets = [4, 2, 0], sizes = [1, 2, 32], strides = [1, 1, 1]} : vector<8x4x32xf32> to vector<1x2x32xf32>
    %282 = vector.shape_cast %281 : vector<1x2x32xf32> to vector<2x32xf32>
    %283 = vector.extract_strided_slice %272 {offsets = [3, 2, 0], sizes = [1, 2, 32], strides = [1, 1, 1]} : vector<8x4x32xf32> to vector<1x2x32xf32>
    %284 = vector.shape_cast %283 : vector<1x2x32xf32> to vector<2x32xf32>
    %285 = vector.extract_strided_slice %272 {offsets = [2, 2, 0], sizes = [1, 2, 32], strides = [1, 1, 1]} : vector<8x4x32xf32> to vector<1x2x32xf32>
    %286 = vector.shape_cast %285 : vector<1x2x32xf32> to vector<2x32xf32>
    %287 = vector.extract_strided_slice %272 {offsets = [1, 2, 0], sizes = [1, 2, 32], strides = [1, 1, 1]} : vector<8x4x32xf32> to vector<1x2x32xf32>
    %288 = vector.shape_cast %287 : vector<1x2x32xf32> to vector<2x32xf32>
    %289 = vector.extract_strided_slice %272 {offsets = [0, 2, 0], sizes = [1, 2, 32], strides = [1, 1, 1]} : vector<8x4x32xf32> to vector<1x2x32xf32>
    %290 = vector.shape_cast %289 : vector<1x2x32xf32> to vector<2x32xf32>
    %291 = tpu.concatenate %276, %278, %280, %282, %284, %286, %288, %290 in 0 : vector<2x32xf32>, vector<2x32xf32>, vector<2x32xf32>, vector<2x32xf32>, vector<2x32xf32>, vector<2x32xf32>, vector<2x32xf32>, vector<2x32xf32> -> vector<16x32xf32>
    %c0_66 = arith.constant 0 : index
    %c0_67 = arith.constant 0 : index
    %292 = vector.load %arg6[%c0_66, %c0_67] : memref<32x32xf32, #tpu.memory_space<vmem>>, vector<32x32xf32>
    %cst_68 = arith.constant dense<0.000000e+00> : vector<16x32xf32>
    %293 = tpu.matmul %274, %292, %cst_68 {dimension_numbers = #tpu.dot_dimension_numbers<[1], [0], [0], [1], [0, 0, 1, 1], [], []>} : vector<16x32xf32>, vector<32x32xf32>, vector<16x32xf32> -> vector<16x32xf32>
    %c0_69 = arith.constant 0 : index
    %c0_70 = arith.constant 0 : index
    %294 = vector.load %arg7[%c0_69, %c0_70] : memref<32x32xf32, #tpu.memory_space<vmem>>, vector<32x32xf32>
    %cst_71 = arith.constant dense<0.000000e+00> : vector<16x32xf32>
    %295 = tpu.matmul %291, %294, %cst_71 {dimension_numbers = #tpu.dot_dimension_numbers<[1], [0], [0], [1], [0, 0, 1, 1], [], []>} : vector<16x32xf32>, vector<32x32xf32>, vector<16x32xf32> -> vector<16x32xf32>
    %296 = arith.addf %293, %295 : vector<16x32xf32>
    %c0_72 = arith.constant 0 : index
    %c0_73 = arith.constant 0 : index
    %297 = vector.load %arg8[%c0_72, %c0_73] : memref<1x32xf32, #tpu.memory_space<vmem>>, vector<1x32xf32>
    %298 = vector.broadcast %297 : vector<1x32xf32> to vector<16x32xf32>
    %299 = arith.addf %296, %298 : vector<16x32xf32>
    %300 = math.tanh %299 : vector<16x32xf32>
    %c0_74 = arith.constant 0 : index
    %c0_75 = arith.constant 0 : index
    %301 = vector.load %arg9[%c0_74, %c0_75] : memref<16x32xf32, #tpu.memory_space<vmem>>, vector<16x32xf32>
    tpu.vector_store %arg9[%c0_74, %c0_75], %300 {strides = array<i32>} : memref<16x32xf32, #tpu.memory_space<vmem>>, vector<16x32xf32>,
    return
  }
}

</mosaic_0001>

<llo_original>
// kernel: _ae_textencoder_impl.1
$region0: #{_ae_textencoder_impl.1}
  #allocation0 [shape = 'u32[]', space=smem, size = 0x4, offset = 0x4, fixed_abs, tag = 'smem constant byte address 0x4 - core index']
  #allocation1 [shape = 'u32[144,128]{1,0:T(1,128)}', space=vmem, size = 0x12000, scoped, tag = 'internal scratch']
  #allocation2 [shape = 'f32[8,4,128]{2,1,0:T(4,128)}', space=vmem, size = 0x4000, scoped, tag = 'scratch operand']
  #allocation3 [shape = 'f32[8,4,32]{2,1,0:T(4,128)}', space=vmem, size = 0x4000, scoped, tag = 'scratch operand']
  %s0 = inlined_call_operand.vmem [shape: f32[8,4,64], index: 0, kind: input, shape index: {}]
  %s1 = inlined_call_operand.vmem [shape: f32[64,16], index: 1, kind: input, shape index: {}]
  %s2 = inlined_call_operand.vmem [shape: f32[1,16], index: 2, kind: input, shape index: {}]
  %s3 = inlined_call_operand.vmem [shape: f32[16,256], index: 3, kind: input, shape index: {}]
  %s4 = inlined_call_operand.vmem [shape: f32[4,128], index: 4, kind: input, shape index: {}]
  %s5 = inlined_call_operand.vmem [shape: bf16[32,256], index: 5, kind: input, shape index: {}]
  %s6 = inlined_call_operand.vmem [shape: f32[32,32], index: 6, kind: input, shape index: {}]
  %s7 = inlined_call_operand.vmem [shape: f32[32,32], index: 7, kind: input, shape index: {}]
  %s8 = inlined_call_operand.vmem [shape: f32[1,32], index: 8, kind: input, shape index: {}]
  %s9 = inlined_call_operand.vmem [shape: f32[16,32], index: 9, kind: output, shape index: {}]
  %s10 = sld [smem:[#allocation0]]
  $region46: #{_ae_textencoder_impl.1} parent=0
    _
  %s12 = ssub.s32 1, %s10
  %s13 = scalar_select 0, %s12, %s10
  // Predicated region
  $region2: #{_ae_textencoder_impl.1} parent=0 // pred_check
    _
  $region3: #{_ae_textencoder_impl.1} parent=0 // pred_check_branch
    %15 = sbr.rel (0) target = $region5
  $region4: #{_ae_textencoder_impl.1} parent=0 // pred_region
    _
  $region5: #{_ae_textencoder_impl.1} parent=0 // pred_fallthru
    _
  // Predicated region
  $region6: #{_ae_textencoder_impl.1} parent=0 // pred_check
    _
  $region7: #{_ae_textencoder_impl.1} parent=0 // pred_check_branch
    %17 = sbr.rel (0) target = $region9
  $region8: #{_ae_textencoder_impl.1} parent=0 // pred_region
    _
  $region9: #{_ae_textencoder_impl.1} parent=0 // pred_fallthru
    _
  // Predicated region
  $region10: #{_ae_textencoder_impl.1} parent=0 // pred_check
    _
  $region11: #{_ae_textencoder_impl.1} parent=0 // pred_check_branch
    %19 = sbr.rel (0) target = $region13
  $region12: #{_ae_textencoder_impl.1} parent=0 // pred_region
    _
  $region13: #{_ae_textencoder_impl.1} parent=0 // pred_fallthru
    _
  // Predicated region
  $region14: #{_ae_textencoder_impl.1} parent=0 // pred_check
    _
  $region15: #{_ae_textencoder_impl.1} parent=0 // pred_check_branch
    %21 = sbr.rel (0) target = $region17
  $region16: #{_ae_textencoder_impl.1} parent=0 // pred_region
    _
  $region17: #{_ae_textencoder_impl.1} parent=0 // pred_fallthru
    _
  // Predicated region
  $region18: #{_ae_textencoder_impl.1} parent=0 // pred_check
    _
  $region19: #{_ae_textencoder_impl.1} parent=0 // pred_check_branch
    %23 = sbr.rel (0) target = $region21
  $region20: #{_ae_textencoder_impl.1} parent=0 // pred_region
    _
  $region21: #{_ae_textencoder_impl.1} parent=0 // pred_fallthru
    _
  // Predicated region
  $region22: #{_ae_textencoder_impl.1} parent=0 // pred_check
    _
  $region23: #{_ae_textencoder_impl.1} parent=0 // pred_check_branch
    %25 = sbr.rel (0) target = $region25
  $region24: #{_ae_textencoder_impl.1} parent=0 // pred_region
    _
  $region25: #{_ae_textencoder_impl.1} parent=0 // pred_fallthru
    _
  // Predicated region
  $region26: #{_ae_textencoder_impl.1} parent=0 // pred_check
    _
  $region27: #{_ae_textencoder_impl.1} parent=0 // pred_check_branch
    %27 = sbr.rel (0) target = $region29
  $region28: #{_ae_textencoder_impl.1} parent=0 // pred_region
    _
  $region29: #{_ae_textencoder_impl.1} parent=0 // pred_fallthru
    _
  // Predicated region
  $region30: #{_ae_textencoder_impl.1} parent=0 // pred_check
    _
  $region31: #{_ae_textencoder_impl.1} parent=0 // pred_check_branch
    %29 = sbr.rel (0) target = $region33
  $region32: #{_ae_textencoder_impl.1} parent=0 // pred_region
    _
  $region33: #{_ae_textencoder_impl.1} parent=0 // pred_fallthru
    _
  // Predicated region
  $region34: #{_ae_textencoder_impl.1} parent=0 // pred_check
    _
  $region35: #{_ae_textencoder_impl.1} parent=0 // pred_check_branch
    %31 = sbr.rel (0) target = $region37
  $region36: #{_ae_textencoder_impl.1} parent=0 // pred_region
    _
  $region37: #{_ae_textencoder_impl.1} parent=0 // pred_fallthru
    _
  %v33 = vlaneseq
  %v34 = vshrl.u32 %v33, 7
  %vm35 = vcmp.lt.s32.totalorder %v34, 2
  %v36 = vlaneseq
  %v37 = vand.u32 %v36, 127
  %vm38 = vcmp.ge.s32.totalorder %v37, 64
  %vm39 = vcmp.lt.s32.totalorder %v37, 96
  %vm40 = vmand %vm38, %vm39
  %v41 = vsel %vm40, 1.0, 0.5
  %v42 = vsel %vm40, 0.0, 0.5
  %v43 = vld [vmem:[%s0] sm:$0xf]
  %v44 = vld [vmem:[%s0 + $0x4] sm:$0xf]
  %v45 = vld [vmem:[%s0 + $0x8] sm:$0xf]
  %v46 = vld [vmem:[%s0 + $0xc] sm:$0xf]
  %v47 = vld [vmem:[%s0 + $0x10] sm:$0xf]
  %v48 = vld [vmem:[%s0 + $0x14] sm:$0xf]
  %v49 = vld [vmem:[%s0 + $0x18] sm:$0xf]
  %v50 = vld [vmem:[%s0 + $0x1c] sm:$0xf]
  %v51 = vld [vmem:[%s1] sm:$0xff]
  %v52 = vld [vmem:[%s1 + $0x8] sm:$0xff]
  %v53 = vld [vmem:[%s1 + $0x10] sm:$0xff]
  %v54 = vld [vmem:[%s1 + $0x18] sm:$0xff]
  %v55 = vld [vmem:[%s1 + $0x20] sm:$0xff]
  %v56 = vld [vmem:[%s1 + $0x28] sm:$0xff]
  %v57 = vld [vmem:[%s1 + $0x30] sm:$0xff]
  %v58 = vld [vmem:[%s1 + $0x38] sm:$0xff]
  %v59 = vld [vmem:[%s2] sm:$0x1]
  %v61 = vlaneseq
  %v62 = vshrl.u32 %v61, 7
  %v63 = vsub.s32 0, %v62
  %v64 = vrot.slane %v59, %v63
  %v74 = vcombine.low %v43, %v44
  %v75 = vcombine.low %v45, %v46
  %v76 = vcombine.low %v47, %v48
  %v77 = vcombine.low %v49, %v50
  %vm78 = vcmask 523264
  %v79 = vsel %vm78, %v74, 0
  %v81 = vsel %vm78, %v75, 0
  %v83 = vsel %vm78, %v76, 0
  %v85 = vsel %vm78, %v77, 0
  %87 = vmatprep.subr.mxu0 0.0
  %88 = vmatpush1.msra.mxu0 %v51
  %89 = vmatprep.subr.mxu0 0.0
  %90 = vmatpush1.msra.mxu0 %v52
  %91 = vmatprep.subr.mxu0 0.0
  %92 = vmatpush1.msra.mxu0 %v53
  %93 = vmatprep.subr.mxu0 0.0
  %94 = vmatpush1.msra.mxu0 %v54
  %95 = vmatprep.subr.mxu0 0.0
  %96 = vmatpush1.msra.mxu0 %v55
  %97 = vmatprep.subr.mxu0 0.0
  %98 = vmatpush1.msra.mxu0 %v56
  %99 = vmatprep.subr.mxu0 0.0
  %100 = vmatpush1.msra.mxu0 %v57
  %101 = vmatprep.subr.mxu0 0.0
  %102 = vmatpush1.msra.mxu0 %v58
  %103 = vmatprep.subr.mxu0 0.0
  %104 = vmatpush1.msra.mxu0 0.0
  %105 = vmatprep.subr.mxu0 0.0
  %106 = vmatpush1.msra.mxu0 0.0
  %107 = vmatprep.subr.mxu0 0.0
  %108 = vmatpush1.msra.mxu0 0.0
  %109 = vmatprep.subr.mxu0 0.0
  %110 = vmatpush1.msra.mxu0 0.0
  %111 = vmatprep.subr.mxu0 0.0
  %112 = vmatpush1.msra.mxu0 0.0
  %113 = vmatprep.subr.mxu0 0.0
  %114 = vmatpush1.msra.mxu0 0.0
  %115 = vmatprep.subr.mxu0 0.0
  %116 = vmatpush1.msra.mxu0 0.0
  %117 = vmatprep.subr.mxu0 0.0
  %118 = vmatpush1.msra.mxu0 0.0
  %119 = vmatprep.subr.mxu0 0.0
  %120 = vmatpush1.msra.mxu0 0.0
  %121 = vmatprep.subr.mxu0 0.0
  %122 = vmatpush1.msra.mxu0 0.0
  %123 = vmatprep.subr.mxu0 0.0
  %124 = vmatpush1.msra.mxu0 0.0
  %125 = vmatprep.subr.mxu0 0.0
  %126 = vmatpush1.msra.mxu0 0.0
  %127 = vmatprep.subr.mxu0 0.0
  %128 = vmatpush1.msra.mxu0 0.0
  %129 = vmatprep.subr.mxu0 0.0
  %130 = vmatpush1.msra.mxu0 0.0
  %131 = vmatprep.subr.mxu0 0.0
  %132 = vmatpush1.msra.mxu0 0.0
  %133 = vmatprep.subr.mxu0 0.0
  %134 = vmatpush1.msra.mxu0 0.0
  %135 = vmatprep.subr.mxu0 0.0
  %136 = vmatpush1.msra.mxu0 0.0
  %137 = vmatprep.subr.mxu0 0.0
  %138 = vmatpush1.msra.mxu0 0.0
  %139 = vmatprep.subr.mxu0 0.0
  %140 = vmatpush1.msra.mxu0 0.0
  %141 = vmatprep.subr.mxu0 0.0
  %142 = vmatpush1.msra.mxu0 0.0
  %143 = vmatprep.subr.mxu0 0.0
  %144 = vmatpush1.msra.mxu0 0.0
  %145 = vmatprep.subr.mxu0 0.0
  %146 = vmatpush1.msra.mxu0 0.0
  %147 = vmatprep.subr.mxu0 0.0
  %148 = vmatpush1.msra.mxu0 0.0
  %149 = vmatprep.subr.mxu0 0.0
  %150 = vmatpush1.msra.mxu0 0.0
  %151 = vmatprep.mubr.f32.mxu0 0.0
  %152 = vmatmul.mubr.f32.gmra.mrb[0].mxu0 %v79
  %v153 = vpop.f32.mrb[0].mxu0
  %v154 = vadd.f32 %v64, %v153
  %v155 = vpop.f32.mrb[0].mxu0
  %156 = vmatprep.mubr.f32.mxu0 0.0
  %157 = vmatmul.mubr.f32.gmra.mrb[0].mxu0 %v81
  %v158 = vpop.f32.mrb[0].mxu0
  %v159 = vadd.f32 %v64, %v158
  %v160 = vpop.f32.mrb[0].mxu0
  %161 = vmatprep.mubr.f32.mxu0 0.0
  %162 = vmatmul.mubr.f32.gmra.mrb[0].mxu0 %v83
  %v163 = vpop.f32.mrb[0].mxu0
  %v164 = vadd.f32 %v64, %v163
  %v165 = vpop.f32.mrb[0].mxu0
  %166 = vmatprep.mubr.f32.mxu0 0.0
  %167 = vmatmul.mubr.f32.gmra.mrb[0].mxu0 %v85
  %v168 = vpop.f32.mrb[0].mxu0
  %v169 = vadd.f32 %v64, %v168
  %v170 = vpop.f32.mrb[0].mxu0
  %171 = vdwg.mxu0
  %v172 = vtanh.pop %v154
  %v173 = vtanh.pop %v159
  %v174 = vtanh.pop %v164
  %v175 = vtanh.pop %v169
  %v176 = vld [vmem:[%s3] sm:$0xff]
  %v177 = vld [vmem:[%s3 + $0x8] sm:$0xff]
  %v178 = vld [vmem:[%s3 + $0x10] sm:$0xff]
  %v179 = vld [vmem:[%s3 + $0x18] sm:$0xff]
  %vm180 = vcmask 130048
  %v182 = vsel %vm180, %v172, 0
  %v185 = vsel %vm180, %v173, 0
  %v188 = vsel %vm180, %v174, 0
  %v191 = vsel %vm180, %v175, 0
  %193 = vmatprep.subr.mxu0 %v177
  %194 = vmatpush1.msra.mxu0 %v176
  %195 = vmatprep.subr.mxu0 %v179
  %196 = vmatpush1.msra.mxu0 %v178
  %197 = vmatprep.subr.mxu0 0.0
  %198 = vmatpush1.msra.mxu0 0.0
  %199 = vmatprep.subr.mxu0 0.0
  %200 = vmatpush1.msra.mxu0 0.0
  %201 = vmatprep.subr.mxu0 0.0
  %202 = vmatpush1.msra.mxu0 0.0
  %203 = vmatprep.subr.mxu0 0.0
  %204 = vmatpush1.msra.mxu0 0.0
  %205 = vmatprep.subr.mxu0 0.0
  %206 = vmatpush1.msra.mxu0 0.0
  %207 = vmatprep.subr.mxu0 0.0
  %208 = vmatpush1.msra.mxu0 0.0
  %209 = vmatprep.subr.mxu0 0.0
  %210 = vmatpush1.msra.mxu0 0.0
  %211 = vmatprep.subr.mxu0 0.0
  %212 = vmatpush1.msra.mxu0 0.0
  %213 = vmatprep.subr.mxu0 0.0
  %214 = vmatpush1.msra.mxu0 0.0
  %215 = vmatprep.subr.mxu0 0.0
  %216 = vmatpush1.msra.mxu0 0.0
  %217 = vmatprep.subr.mxu0 0.0
  %218 = vmatpush1.msra.mxu0 0.0
  %219 = vmatprep.subr.mxu0 0.0
  %220 = vmatpush1.msra.mxu0 0.0
  %221 = vmatprep.subr.mxu0 0.0
  %222 = vmatpush1.msra.mxu0 0.0
  %223 = vmatprep.subr.mxu0 0.0
  %224 = vmatpush1.msra.mxu0 0.0
  %225 = vmatprep.subr.mxu0 0.0
  %226 = vmatpush1.msra.mxu0 0.0
  %227 = vmatprep.subr.mxu0 0.0
  %228 = vmatpush1.msra.mxu0 0.0
  %229 = vmatprep.subr.mxu0 0.0
  %230 = vmatpush1.msra.mxu0 0.0
  %231 = vmatprep.subr.mxu0 0.0
  %232 = vmatpush1.msra.mxu0 0.0
  %233 = vmatprep.subr.mxu0 0.0
  %234 = vmatpush1.msra.mxu0 0.0
  %235 = vmatprep.subr.mxu0 0.0
  %236 = vmatpush1.msra.mxu0 0.0
  %237 = vmatprep.subr.mxu0 0.0
  %238 = vmatpush1.msra.mxu0 0.0
  %239 = vmatprep.subr.mxu0 0.0
  %240 = vmatpush1.msra.mxu0 0.0
  %241 = vmatprep.subr.mxu0 0.0
  %242 = vmatpush1.msra.mxu0 0.0
  %243 = vmatprep.subr.mxu0 0.0
  %244 = vmatpush1.msra.mxu0 0.0
  %245 = vmatprep.subr.mxu0 0.0
  %246 = vmatpush1.msra.mxu0 0.0
  %247 = vmatprep.subr.mxu0 0.0
  %248 = vmatpush1.msra.mxu0 0.0
  %249 = vmatprep.subr.mxu0 0.0
  %250 = vmatpush1.msra.mxu0 0.0
  %251 = vmatprep.subr.mxu0 0.0
  %252 = vmatpush1.msra.mxu0 0.0
  %253 = vmatprep.subr.mxu0 0.0
  %254 = vmatpush1.msra.mxu0 0.0
  %255 = vmatprep.subr.mxu0 0.0
  %256 = vmatpush1.msra.mxu0 0.0
  %257 = vmatprep.mubr.f32.mxu0 0.0
  %258 = vmatmul.mubr.f32.gmra.mrb[0].mxu0 %v182
  %v259 = vpop.f32.mrb[0].mxu0
  %v260 = vadd.f32 0.0, %v259
  %v261 = vpop.f32.mrb[0].mxu0
  %v262 = vadd.f32 0.0, %v261
  %263 = vmatprep.mubr.f32.mxu0 0.0
  %264 = vmatmul.mubr.f32.gmra.mrb[0].mxu0 %v185
  %v265 = vpop.f32.mrb[0].mxu0
  %v266 = vadd.f32 0.0, %v265
  %v267 = vpop.f32.mrb[0].mxu0
  %v268 = vadd.f32 0.0, %v267
  %269 = vmatprep.mubr.f32.mxu0 0.0
  %270 = vmatmul.mubr.f32.gmra.mrb[0].mxu0 %v188
  %v271 = vpop.f32.mrb[0].mxu0
  %v272 = vadd.f32 0.0, %v271
  %v273 = vpop.f32.mrb[0].mxu0
  %v274 = vadd.f32 0.0, %v273
  %275 = vmatprep.mubr.f32.mxu0 0.0
  %276 = vmatmul.mubr.f32.gmra.mrb[0].mxu0 %v191
  %v277 = vpop.f32.mrb[0].mxu0
  %v278 = vadd.f32 0.0, %v277
  %v279 = vpop.f32.mrb[0].mxu0
  %v280 = vadd.f32 0.0, %v279
  %281 = vdwg.mxu0
  %v290 = vcombine.low %v260, %v262
  %v291 = vcombine.high %v260, %v262
  %v292 = vcombine.low %v266, %v268
  %v293 = vcombine.high %v266, %v268
  %v294 = vcombine.low %v272, %v274
  %v295 = vcombine.high %v272, %v274
  %v296 = vcombine.low %v278, %v280
  %v297 = vcombine.high %v278, %v280
  %v306 = vsel %vm35, 1, 0
  %vm307 = vcmp.eq.s32.totalorder %v306, 1
  %v308 = vcombine.high %v290, %v290
  %v309 = vcombine.high %v291, %v291
  %v310 = vcombine.high %v292, %v292
  %v311 = vcombine.high %v293, %v293
  %v312 = vcombine.high %v294, %v294
  %v313 = vcombine.high %v295, %v295
  %v314 = vcombine.high %v296, %v296
  %v315 = vcombine.high %v297, %v297
  %v324 = vsel %vm307, %v290, %v308
  %v325 = vsel %vm307, %v291, %v309
  %v326 = vsel %vm307, %v292, %v310
  %v327 = vsel %vm307, %v293, %v311
  %v328 = vsel %vm307, %v294, %v312
  %v329 = vsel %vm307, %v295, %v313
  %v330 = vsel %vm307, %v296, %v314
  %v331 = vsel %vm307, %v297, %v315
  %v332 = vld [vmem:[%s4] sm:$0xf]
  %v333 = vadd.f32 %v324, %v332
  %v334 = vadd.f32 %v325, %v332
  %v335 = vadd.f32 %v326, %v332
  %v336 = vadd.f32 %v327, %v332
  %v337 = vadd.f32 %v328, %v332
  %v338 = vadd.f32 %v329, %v332
  %v339 = vadd.f32 %v330, %v332
  %v340 = vadd.f32 %v331, %v332
  %341 = vst [vmem:[#allocation2] sm:$0xf] %v333
  %342 = vst [vmem:[#allocation2 + $0x4] sm:$0xf] %v334
  %343 = vst [vmem:[#allocation2 + $0x8] sm:$0xf] %v335
  %344 = vst [vmem:[#allocation2 + $0xc] sm:$0xf] %v336
  %345 = vst [vmem:[#allocation2 + $0x10] sm:$0xf] %v337
  %346 = vst [vmem:[#allocation2 + $0x14] sm:$0xf] %v338
  %347 = vst [vmem:[#allocation2 + $0x18] sm:$0xf] %v339
  %348 = vst [vmem:[#allocation2 + $0x1c] sm:$0xf] %v340
  %v349 = vld [vmem:[%s5] sm:$0xff]
  %v350 = vld [vmem:[%s5 + $0x8] sm:$0xff]
  %v351 = vld [vmem:[%s5 + $0x10] sm:$0xff]
  %v352 = vld [vmem:[%s5 + $0x18] sm:$0xff]
  %v357 = vunpack.c.l.b16 %v349
  %v358 = vunpack.c.h.b16 %v349
  %v359 = vunpack.c.l.b16 %v350
  %v360 = vunpack.c.h.b16 %v350
  %v361 = vunpack.c.l.b16 %v351
  %v362 = vunpack.c.h.b16 %v351
  %v363 = vunpack.c.l.b16 %v352
  %v364 = vunpack.c.h.b16 %v352
  %v365 = vpack.c.b16 %v359, %v357
  %v366 = vpack.c.b16 %v360, %v358
  %v367 = vpack.c.b16 %v363, %v361
  %v368 = vpack.c.b16 %v364, %v362
  %vm373 = vcmask 261120
  %v375 = vsel %vm373, 0, 0
  %377 = vmatprep.subr.bf16.mxu0 %v366
  %378 = vmatpush1.bf16.msra.mxu0 %v365
  %379 = vmatprep.subr.bf16.mxu0 %v368
  %380 = vmatpush1.bf16.msra.mxu0 %v367
  %381 = vmatprep.subr.bf16.mxu0 0
  %382 = vmatpush1.bf16.msra.mxu0 0
  %383 = vmatprep.subr.bf16.mxu0 0
  %384 = vmatpush1.bf16.msra.mxu0 0
  %385 = vmatprep.subr.bf16.mxu0 0
  %386 = vmatpush1.bf16.msra.mxu0 0
  %387 = vmatprep.subr.bf16.mxu0 0
  %388 = vmatpush1.bf16.msra.mxu0 0
  %389 = vmatprep.subr.bf16.mxu0 0
  %390 = vmatpush1.bf16.msra.mxu0 0
  %391 = vmatprep.subr.bf16.mxu0 0
  %392 = vmatpush1.bf16.msra.mxu0 0
  %393 = vmatprep.subr.bf16.mxu0 0
  %394 = vmatpush1.bf16.msra.mxu0 0
  %395 = vmatprep.subr.bf16.mxu0 0
  %396 = vmatpush1.bf16.msra.mxu0 0
  %397 = vmatprep.subr.bf16.mxu0 0
  %398 = vmatpush1.bf16.msra.mxu0 0
  %399 = vmatprep.subr.bf16.mxu0 0
  %400 = vmatpush1.bf16.msra.mxu0 0
  %401 = vmatprep.subr.bf16.mxu0 0
  %402 = vmatpush1.bf16.msra.mxu0 0
  %403 = vmatprep.subr.bf16.mxu0 0
  %404 = vmatpush1.bf16.msra.mxu0 0
  %405 = vmatprep.subr.bf16.mxu0 0
  %406 = vmatpush1.bf16.msra.mxu0 0
  %407 = vmatprep.subr.bf16.mxu0 0
  %408 = vmatpush1.bf16.msra.mxu0 0
  %409 = vmatprep.mubr.bf16.mxu0 0
  %410 = vmatmul.mubr.bf16.gmra.mrb[0].mxu0 %v375
  %v411 = vpop.f32.mrb[0].mxu0
  %v412 = vadd.f32 0.0, %v411
  %v413 = vpop.f32.mrb[0].mxu0
  %v414 = vadd.f32 0.0, %v413
  %v415 = vpop.f32.mrb[0].mxu0
  %v416 = vpop.f32.mrb[0].mxu0
  %417 = vdwg.mxu0
  %v418 = vld [vmem:[#allocation2] sm:$0xf]
  %v419 = vsel %vm307, %v412, %v414
  %v420 = vadd.f32 %v418, %v419
  %v421 = vtanh.pop %v420
  %v422 = vmul.f32 %v421, %v41
  %v423 = vadd.f32 %v422, %v42
  %v424 = vmul.f32 %v423, 0.0
  %426 = vrot.lane.b32.xlu0 %v423, 64
  %v427 = vpop.permute.xlu0 %426
  %v429 = vmul.f32 %v423, %v427
  %431 = vrot.lane.b32.xlu0 %v429, 32
  %v432 = vpop.permute.xlu0 %431
  %v434 = vadd.f32 %v424, %v432
  %v435 = vtanh.pop %v434
  %437 = vrot.lane.b32.xlu0 %v435, 64
  %v438 = vpop.permute.xlu0 %437
  %v440 = vmul.f32 %v423, %v438
  %442 = vrot.lane.b32.xlu0 %v440, 32
  %v443 = vpop.permute.xlu0 %442
  %vm445 = vcmask 257024
  %446 = vst.msk [vmem:[#allocation3] sm:$0xf] %vm445, %v443
  %v447 = vpack.c.bf16 %v440, %v440
  %449 = vrot.lane.b32.xlu0 %v447, 32
  %v450 = vpop.permute.xlu0 %449
  %v452 = vsel %vm373, %v450, 0
  %454 = vmatprep.subr.bf16.mxu0 %v366
  %455 = vmatpush1.bf16.msra.mxu0 %v365
  %456 = vmatprep.subr.bf16.mxu0 %v368
  %457 = vmatpush1.bf16.msra.mxu0 %v367
  %458 = vmatprep.subr.bf16.mxu0 0
  %459 = vmatpush1.bf16.msra.mxu0 0
  %460 = vmatprep.subr.bf16.mxu0 0
  %461 = vmatpush1.bf16.msra.mxu0 0
  %462 = vmatprep.subr.bf16.mxu0 0
  %463 = vmatpush1.bf16.msra.mxu0 0
  %464 = vmatprep.subr.bf16.mxu0 0
  %465 = vmatpush1.bf16.msra.mxu0 0
  %466 = vmatprep.subr.bf16.mxu0 0
  %467 = vmatpush1.bf16.msra.mxu0 0
  %468 = vmatprep.subr.bf16.mxu0 0
  %469 = vmatpush1.bf16.msra.mxu0 0
  %470 = vmatprep.subr.bf16.mxu0 0
  %471 = vmatpush1.bf16.msra.mxu0 0
  %472 = vmatprep.subr.bf16.mxu0 0
  %473 = vmatpush1.bf16.msra.mxu0 0
  %474 = vmatprep.subr.bf16.mxu0 0
  %475 = vmatpush1.bf16.msra.mxu0 0
  %476 = vmatprep.subr.bf16.mxu0 0
  %477 = vmatpush1.bf16.msra.mxu0 0
  %478 = vmatprep.subr.bf16.mxu0 0
  %479 = vmatpush1.bf16.msra.mxu0 0
  %480 = vmatprep.subr.bf16.mxu0 0
  %481 = vmatpush1.bf16.msra.mxu0 0
  %482 = vmatprep.subr.bf16.mxu0 0
  %483 = vmatpush1.bf16.msra.mxu0 0
  %484 = vmatprep.subr.bf16.mxu0 0
  %485 = vmatpush1.bf16.msra.mxu0 0
  %486 = vmatprep.mubr.bf16.mxu0 0
  %487 = vmatmul.mubr.bf16.gmra.mrb[0].mxu0 %v452
  %v488 = vpop.f32.mrb[0].mxu0
  %v489 = vadd.f32 0.0, %v488
  %v490 = vpop.f32.mrb[0].mxu0
  %v491 = vadd.f32 0.0, %v490
  %v492 = vpop.f32.mrb[0].mxu0
  %v493 = vpop.f32.mrb[0].mxu0
  %494 = vdwg.mxu0
  %s495 = scalar_lea.vmem [#allocation2], 4
  %v496 = vld [vmem:[%s495] sm:$0xf]
  %v497 = vsel %vm307, %v489, %v491
  %v498 = vadd.f32 %v496, %v497
  %v499 = vtanh.pop %v498
  %v500 = vmul.f32 %v499, %v41
  %v501 = vadd.f32 %v500, %v42
  %v502 = vmul.f32 %v501, %v434
  %504 = vrot.lane.b32.xlu0 %v501, 64
  %v505 = vpop.permute.xlu0 %504
  %v507 = vmul.f32 %v501, %v505
  %509 = vrot.lane.b32.xlu0 %v507, 32
  %v510 = vpop.permute.xlu0 %509
  %v512 = vadd.f32 %v502, %v510
  %v513 = vtanh.pop %v512
  %515 = vrot.lane.b32.xlu0 %v513, 64
  %v516 = vpop.permute.xlu0 %515
  %v518 = vmul.f32 %v501, %v516
  %520 = vrot.lane.b32.xlu0 %v518, 32
  %v521 = vpop.permute.xlu0 %520
  %s523 = scalar_lea.vmem [#allocation3], 4
  %524 = vst.msk [vmem:[%s523] sm:$0xf] %vm445, %v521
  %v525 = vpack.c.bf16 %v518, %v518
  %527 = vrot.lane.b32.xlu0 %v525, 32
  %v528 = vpop.permute.xlu0 %527
  %v530 = vsel %vm373, %v528, 0
  %532 = vmatprep.subr.bf16.mxu0 %v366
  %533 = vmatpush1.bf16.msra.mxu0 %v365
  %534 = vmatprep.subr.bf16.mxu0 %v368
  %535 = vmatpush1.bf16.msra.mxu0 %v367
  %536 = vmatprep.subr.bf16.mxu0 0
  %537 = vmatpush1.bf16.msra.mxu0 0
  %538 = vmatprep.subr.bf16.mxu0 0
  %539 = vmatpush1.bf16.msra.mxu0 0
  %540 = vmatprep.subr.bf16.mxu0 0
  %541 = vmatpush1.bf16.msra.mxu0 0
  %542 = vmatprep.subr.bf16.mxu0 0
  %543 = vmatpush1.bf16.msra.mxu0 0
  %544 = vmatprep.subr.bf16.mxu0 0
  %545 = vmatpush1.bf16.msra.mxu0 0
  %546 = vmatprep.subr.bf16.mxu0 0
  %547 = vmatpush1.bf16.msra.mxu0 0
  %548 = vmatprep.subr.bf16.mxu0 0
  %549 = vmatpush1.bf16.msra.mxu0 0
  %550 = vmatprep.subr.bf16.mxu0 0
  %551 = vmatpush1.bf16.msra.mxu0 0
  %552 = vmatprep.subr.bf16.mxu0 0
  %553 = vmatpush1.bf16.msra.mxu0 0
  %554 = vmatprep.subr.bf16.mxu0 0
  %555 = vmatpush1.bf16.msra.mxu0 0
  %556 = vmatprep.subr.bf16.mxu0 0
  %557 = vmatpush1.bf16.msra.mxu0 0
  %558 = vmatprep.subr.bf16.mxu0 0
  %559 = vmatpush1.bf16.msra.mxu0 0
  %560 = vmatprep.subr.bf16.mxu0 0
  %561 = vmatpush1.bf16.msra.mxu0 0
  %562 = vmatprep.subr.bf16.mxu0 0
  %563 = vmatpush1.bf16.msra.mxu0 0
  %564 = vmatprep.mubr.bf16.mxu0 0
  %565 = vmatmul.mubr.bf16.gmra.mrb[0].mxu0 %v530
  %v566 = vpop.f32.mrb[0].mxu0
  %v567 = vadd.f32 0.0, %v566
  %v568 = vpop.f32.mrb[0].mxu0
  %v569 = vadd.f32 0.0, %v568
  %v570 = vpop.f32.mrb[0].mxu0
  %v571 = vpop.f32.mrb[0].mxu0
  %572 = vdwg.mxu0
  %s573 = scalar_lea.vmem [#allocation2], 8
  %v574 = vld [vmem:[%s573] sm:$0xf]
  %v575 = vsel %vm307, %v567, %v569
  %v576 = vadd.f32 %v574, %v575
  %v577 = vtanh.pop %v576
  %v578 = vmul.f32 %v577, %v41
  %v579 = vadd.f32 %v578, %v42
  %v580 = vmul.f32 %v579, %v512
  %582 = vrot.lane.b32.xlu0 %v579, 64
  %v583 = vpop.permute.xlu0 %582
  %v585 = vmul.f32 %v579, %v583
  %587 = vrot.lane.b32.xlu0 %v585, 32
  %v588 = vpop.permute.xlu0 %587
  %v590 = vadd.f32 %v580, %v588
  %v591 = vtanh.pop %v590
  %593 = vrot.lane.b32.xlu0 %v591, 64
  %v594 = vpop.permute.xlu0 %593
  %v596 = vmul.f32 %v579, %v594
  %598 = vrot.lane.b32.xlu0 %v596, 32
  %v599 = vpop.permute.xlu0 %598
  %s601 = scalar_lea.vmem [#allocation3], 8
  %602 = vst.msk [vmem:[%s601] sm:$0xf] %vm445, %v599
  %v603 = vpack.c.bf16 %v596, %v596
  %605 = vrot.lane.b32.xlu0 %v603, 32
  %v606 = vpop.permute.xlu0 %605
  %v608 = vsel %vm373, %v606, 0
  %610 = vmatprep.subr.bf16.mxu0 %v366
  %611 = vmatpush1.bf16.msra.mxu0 %v365
  %612 = vmatprep.subr.bf16.mxu0 %v368
  %613 = vmatpush1.bf16.msra.mxu0 %v367
  %614 = vmatprep.subr.bf16.mxu0 0
  %615 = vmatpush1.bf16.msra.mxu0 0
  %616 = vmatprep.subr.bf16.mxu0 0
  %617 = vmatpush1.bf16.msra.mxu0 0
  %618 = vmatprep.subr.bf16.mxu0 0
  %619 = vmatpush1.bf16.msra.mxu0 0
  %620 = vmatprep.subr.bf16.mxu0 0
  %621 = vmatpush1.bf16.msra.mxu0 0
  %622 = vmatprep.subr.bf16.mxu0 0
  %623 = vmatpush1.bf16.msra.mxu0 0
  %624 = vmatprep.subr.bf16.mxu0 0
  %625 = vmatpush1.bf16.msra.mxu0 0
  %626 = vmatprep.subr.bf16.mxu0 0
  %627 = vmatpush1.bf16.msra.mxu0 0
  %628 = vmatprep.subr.bf16.mxu0 0
  %629 = vmatpush1.bf16.msra.mxu0 0
  %630 = vmatprep.subr.bf16.mxu0 0
  %631 = vmatpush1.bf16.msra.mxu0 0
  %632 = vmatprep.subr.bf16.mxu0 0
  %633 = vmatpush1.bf16.msra.mxu0 0
  %634 = vmatprep.subr.bf16.mxu0 0
  %635 = vmatpush1.bf16.msra.mxu0 0
  %636 = vmatprep.subr.bf16.mxu0 0
  %637 = vmatpush1.bf16.msra.mxu0 0
  %638 = vmatprep.subr.bf16.mxu0 0
  %639 = vmatpush1.bf16.msra.mxu0 0
  %640 = vmatprep.subr.bf16.mxu0 0
  %641 = vmatpush1.bf16.msra.mxu0 0
  %642 = vmatprep.mubr.bf16.mxu0 0
  %643 = vmatmul.mubr.bf16.gmra.mrb[0].mxu0 %v608
  %v644 = vpop.f32.mrb[0].mxu0
  %v645 = vadd.f32 0.0, %v644
  %v646 = vpop.f32.mrb[0].mxu0
  %v647 = vadd.f32 0.0, %v646
  %v648 = vpop.f32.mrb[0].mxu0
  %v649 = vpop.f32.mrb[0].mxu0
  %650 = vdwg.mxu0
  %s651 = scalar_lea.vmem [#allocation2], 12
  %v652 = vld [vmem:[%s651] sm:$0xf]
  %v653 = vsel %vm307, %v645, %v647
  %v654 = vadd.f32 %v652, %v653
  %v655 = vtanh.pop %v654
  %v656 = vmul.f32 %v655, %v41
  %v657 = vadd.f32 %v656, %v42
  %v658 = vmul.f32 %v657, %v590
  %660 = vrot.lane.b32.xlu0 %v657, 64
  %v661 = vpop.permute.xlu0 %660
  %v663 = vmul.f32 %v657, %v661
  %665 = vrot.lane.b32.xlu0 %v663, 32
  %v666 = vpop.permute.xlu0 %665
  %v668 = vadd.f32 %v658, %v666
  %v669 = vtanh.pop %v668
  %671 = vrot.lane.b32.xlu0 %v669, 64
  %v672 = vpop.permute.xlu0 %671
  %v674 = vmul.f32 %v657, %v672
  %676 = vrot.lane.b32.xlu0 %v674, 32
  %v677 = vpop.permute.xlu0 %676
  %s679 = scalar_lea.vmem [#allocation3], 12
  %680 = vst.msk [vmem:[%s679] sm:$0xf] %vm445, %v677
  %v681 = vpack.c.bf16 %v674, %v674
  %683 = vrot.lane.b32.xlu0 %v681, 32
  %v684 = vpop.permute.xlu0 %683
  %v686 = vsel %vm373, %v684, 0
  %688 = vmatprep.subr.bf16.mxu0 %v366
  %689 = vmatpush1.bf16.msra.mxu0 %v365
  %690 = vmatprep.subr.bf16.mxu0 %v368
  %691 = vmatpush1.bf16.msra.mxu0 %v367
  %692 = vmatprep.subr.bf16.mxu0 0
  %693 = vmatpush1.bf16.msra.mxu0 0
  %694 = vmatprep.subr.bf16.mxu0 0
  %695 = vmatpush1.bf16.msra.mxu0 0
  %696 = vmatprep.subr.bf16.mxu0 0
  %697 = vmatpush1.bf16.msra.mxu0 0
  %698 = vmatprep.subr.bf16.mxu0 0
  %699 = vmatpush1.bf16.msra.mxu0 0
  %700 = vmatprep.subr.bf16.mxu0 0
  %701 = vmatpush1.bf16.msra.mxu0 0
  %702 = vmatprep.subr.bf16.mxu0 0
  %703 = vmatpush1.bf16.msra.mxu0 0
  %704 = vmatprep.subr.bf16.mxu0 0
  %705 = vmatpush1.bf16.msra.mxu0 0
  %706 = vmatprep.subr.bf16.mxu0 0
  %707 = vmatpush1.bf16.msra.mxu0 0
  %708 = vmatprep.subr.bf16.mxu0 0
  %709 = vmatpush1.bf16.msra.mxu0 0
  %710 = vmatprep.subr.bf16.mxu0 0
  %711 = vmatpush1.bf16.msra.mxu0 0
  %712 = vmatprep.subr.bf16.mxu0 0
  %713 = vmatpush1.bf16.msra.mxu0 0
  %714 = vmatprep.subr.bf16.mxu0 0
  %715 = vmatpush1.bf16.msra.mxu0 0
  %716 = vmatprep.subr.bf16.mxu0 0
  %717 = vmatpush1.bf16.msra.mxu0 0
  %718 = vmatprep.subr.bf16.mxu0 0
  %719 = vmatpush1.bf16.msra.mxu0 0
  %720 = vmatprep.mubr.bf16.mxu0 0
  %721 = vmatmul.mubr.bf16.gmra.mrb[0].mxu0 %v686
  %v722 = vpop.f32.mrb[0].mxu0
  %v723 = vadd.f32 0.0, %v722
  %v724 = vpop.f32.mrb[0].mxu0
  %v725 = vadd.f32 0.0, %v724
  %v726 = vpop.f32.mrb[0].mxu0
  %v727 = vpop.f32.mrb[0].mxu0
  %728 = vdwg.mxu0
  %s729 = scalar_lea.vmem [#allocation2], 16
  %v730 = vld [vmem:[%s729] sm:$0xf]
  %v731 = vsel %vm307, %v723, %v725
  %v732 = vadd.f32 %v730, %v731
  %v733 = vtanh.pop %v732
  %v734 = vmul.f32 %v733, %v41
  %v735 = vadd.f32 %v734, %v42
  %v736 = vmul.f32 %v735, %v668
  %738 = vrot.lane.b32.xlu0 %v735, 64
  %v739 = vpop.permute.xlu0 %738
  %v741 = vmul.f32 %v735, %v739
  %743 = vrot.lane.b32.xlu0 %v741, 32
  %v744 = vpop.permute.xlu0 %743
  %v746 = vadd.f32 %v736, %v744
  %v747 = vtanh.pop %v746
  %749 = vrot.lane.b32.xlu0 %v747, 64
  %v750 = vpop.permute.xlu0 %749
  %v752 = vmul.f32 %v735, %v750
  %754 = vrot.lane.b32.xlu0 %v752, 32
  %v755 = vpop.permute.xlu0 %754
  %s757 = scalar_lea.vmem [#allocation3], 16
  %758 = vst.msk [vmem:[%s757] sm:$0xf] %vm445, %v755
  %v759 = vpack.c.bf16 %v752, %v752
  %761 = vrot.lane.b32.xlu0 %v759, 32
  %v762 = vpop.permute.xlu0 %761
  %v764 = vsel %vm373, %v762, 0
  %766 = vmatprep.subr.bf16.mxu0 %v366
  %767 = vmatpush1.bf16.msra.mxu0 %v365
  %768 = vmatprep.subr.bf16.mxu0 %v368
  %769 = vmatpush1.bf16.msra.mxu0 %v367
  %770 = vmatprep.subr.bf16.mxu0 0
  %771 = vmatpush1.bf16.msra.mxu0 0
  %772 = vmatprep.subr.bf16.mxu0 0
  %773 = vmatpush1.bf16.msra.mxu0 0
  %774 = vmatprep.subr.bf16.mxu0 0
  %775 = vmatpush1.bf16.msra.mxu0 0
  %776 = vmatprep.subr.bf16.mxu0 0
  %777 = vmatpush1.bf16.msra.mxu0 0
  %778 = vmatprep.subr.bf16.mxu0 0
  %779 = vmatpush1.bf16.msra.mxu0 0
  %780 = vmatprep.subr.bf16.mxu0 0
  %781 = vmatpush1.bf16.msra.mxu0 0
  %782 = vmatprep.subr.bf16.mxu0 0
  %783 = vmatpush1.bf16.msra.mxu0 0
  %784 = vmatprep.subr.bf16.mxu0 0
  %785 = vmatpush1.bf16.msra.mxu0 0
  %786 = vmatprep.subr.bf16.mxu0 0
  %787 = vmatpush1.bf16.msra.mxu0 0
  %788 = vmatprep.subr.bf16.mxu0 0
  %789 = vmatpush1.bf16.msra.mxu0 0
  %790 = vmatprep.subr.bf16.mxu0 0
  %791 = vmatpush1.bf16.msra.mxu0 0
  %792 = vmatprep.subr.bf16.mxu0 0
  %793 = vmatpush1.bf16.msra.mxu0 0
  %794 = vmatprep.subr.bf16.mxu0 0
  %795 = vmatpush1.bf16.msra.mxu0 0
  %796 = vmatprep.subr.bf16.mxu0 0
  %797 = vmatpush1.bf16.msra.mxu0 0
  %798 = vmatprep.mubr.bf16.mxu0 0
  %799 = vmatmul.mubr.bf16.gmra.mrb[0].mxu0 %v764
  %v800 = vpop.f32.mrb[0].mxu0
  %v801 = vadd.f32 0.0, %v800
  %v802 = vpop.f32.mrb[0].mxu0
  %v803 = vadd.f32 0.0, %v802
  %v804 = vpop.f32.mrb[0].mxu0
  %v805 = vpop.f32.mrb[0].mxu0
  %806 = vdwg.mxu0
  %s807 = scalar_lea.vmem [#allocation2], 20
  %v808 = vld [vmem:[%s807] sm:$0xf]
  %v809 = vsel %vm307, %v801, %v803
  %v810 = vadd.f32 %v808, %v809
  %v811 = vtanh.pop %v810
  %v812 = vmul.f32 %v811, %v41
  %v813 = vadd.f32 %v812, %v42
  %v814 = vmul.f32 %v813, %v746
  %816 = vrot.lane.b32.xlu0 %v813, 64
  %v817 = vpop.permute.xlu0 %816
  %v819 = vmul.f32 %v813, %v817
  %821 = vrot.lane.b32.xlu0 %v819, 32
  %v822 = vpop.permute.xlu0 %821
  %v824 = vadd.f32 %v814, %v822
  %v825 = vtanh.pop %v824
  %827 = vrot.lane.b32.xlu0 %v825, 64
  %v828 = vpop.permute.xlu0 %827
  %v830 = vmul.f32 %v813, %v828
  %832 = vrot.lane.b32.xlu0 %v830, 32
  %v833 = vpop.permute.xlu0 %832
  %s835 = scalar_lea.vmem [#allocation3], 20
  %836 = vst.msk [vmem:[%s835] sm:$0xf] %vm445, %v833
  %v837 = vpack.c.bf16 %v830, %v830
  %839 = vrot.lane.b32.xlu0 %v837, 32
  %v840 = vpop.permute.xlu0 %839
  %v842 = vsel %vm373, %v840, 0
  %844 = vmatprep.subr.bf16.mxu0 %v366
  %845 = vmatpush1.bf16.msra.mxu0 %v365
  %846 = vmatprep.subr.bf16.mxu0 %v368
  %847 = vmatpush1.bf16.msra.mxu0 %v367
  %848 = vmatprep.subr.bf16.mxu0 0
  %849 = vmatpush1.bf16.msra.mxu0 0
  %850 = vmatprep.subr.bf16.mxu0 0
  %851 = vmatpush1.bf16.msra.mxu0 0
  %852 = vmatprep.subr.bf16.mxu0 0
  %853 = vmatpush1.bf16.msra.mxu0 0
  %854 = vmatprep.subr.bf16.mxu0 0
  %855 = vmatpush1.bf16.msra.mxu0 0
  %856 = vmatprep.subr.bf16.mxu0 0
  %857 = vmatpush1.bf16.msra.mxu0 0
  %858 = vmatprep.subr.bf16.mxu0 0
  %859 = vmatpush1.bf16.msra.mxu0 0
  %860 = vmatprep.subr.bf16.mxu0 0
  %861 = vmatpush1.bf16.msra.mxu0 0
  %862 = vmatprep.subr.bf16.mxu0 0
  %863 = vmatpush1.bf16.msra.mxu0 0
  %864 = vmatprep.subr.bf16.mxu0 0
  %865 = vmatpush1.bf16.msra.mxu0 0
  %866 = vmatprep.subr.bf16.mxu0 0
  %867 = vmatpush1.bf16.msra.mxu0 0
  %868 = vmatprep.subr.bf16.mxu0 0
  %869 = vmatpush1.bf16.msra.mxu0 0
  %870 = vmatprep.subr.bf16.mxu0 0
  %871 = vmatpush1.bf16.msra.mxu0 0
  %872 = vmatprep.subr.bf16.mxu0 0
  %873 = vmatpush1.bf16.msra.mxu0 0
  %874 = vmatprep.subr.bf16.mxu0 0
  %875 = vmatpush1.bf16.msra.mxu0 0
  %876 = vmatprep.mubr.bf16.mxu0 0
  %877 = vmatmul.mubr.bf16.gmra.mrb[0].mxu0 %v842
  %v878 = vpop.f32.mrb[0].mxu0
  %v879 = vadd.f32 0.0, %v878
  %v880 = vpop.f32.mrb[0].mxu0
  %v881 = vadd.f32 0.0, %v880
  %v882 = vpop.f32.mrb[0].mxu0
  %v883 = vpop.f32.mrb[0].mxu0
  %884 = vdwg.mxu0
  %s885 = scalar_lea.vmem [#allocation2], 24
  %v886 = vld [vmem:[%s885] sm:$0xf]
  %v887 = vsel %vm307, %v879, %v881
  %v888 = vadd.f32 %v886, %v887
  %v889 = vtanh.pop %v888
  %v890 = vmul.f32 %v889, %v41
  %v891 = vadd.f32 %v890, %v42
  %v892 = vmul.f32 %v891, %v824
  %894 = vrot.lane.b32.xlu0 %v891, 64
  %v895 = vpop.permute.xlu0 %894
  %v897 = vmul.f32 %v891, %v895
  %899 = vrot.lane.b32.xlu0 %v897, 32
  %v900 = vpop.permute.xlu0 %899
  %v902 = vadd.f32 %v892, %v900
  %v903 = vtanh.pop %v902
  %905 = vrot.lane.b32.xlu0 %v903, 64
  %v906 = vpop.permute.xlu0 %905
  %v908 = vmul.f32 %v891, %v906
  %910 = vrot.lane.b32.xlu0 %v908, 32
  %v911 = vpop.permute.xlu0 %910
  %s913 = scalar_lea.vmem [#allocation3], 24
  %914 = vst.msk [vmem:[%s913] sm:$0xf] %vm445, %v911
  %v915 = vpack.c.bf16 %v908, %v908
  %917 = vrot.lane.b32.xlu0 %v915, 32
  %v918 = vpop.permute.xlu0 %917
  %v920 = vsel %vm373, %v918, 0
  %922 = vmatprep.subr.bf16.mxu0 %v366
  %923 = vmatpush1.bf16.msra.mxu0 %v365
  %924 = vmatprep.subr.bf16.mxu0 %v368
  %925 = vmatpush1.bf16.msra.mxu0 %v367
  %926 = vmatprep.subr.bf16.mxu0 0
  %927 = vmatpush1.bf16.msra.mxu0 0
  %928 = vmatprep.subr.bf16.mxu0 0
  %929 = vmatpush1.bf16.msra.mxu0 0
  %930 = vmatprep.subr.bf16.mxu0 0
  %931 = vmatpush1.bf16.msra.mxu0 0
  %932 = vmatprep.subr.bf16.mxu0 0
  %933 = vmatpush1.bf16.msra.mxu0 0
  %934 = vmatprep.subr.bf16.mxu0 0
  %935 = vmatpush1.bf16.msra.mxu0 0
  %936 = vmatprep.subr.bf16.mxu0 0
  %937 = vmatpush1.bf16.msra.mxu0 0
  %938 = vmatprep.subr.bf16.mxu0 0
  %939 = vmatpush1.bf16.msra.mxu0 0
  %940 = vmatprep.subr.bf16.mxu0 0
  %941 = vmatpush1.bf16.msra.mxu0 0
  %942 = vmatprep.subr.bf16.mxu0 0
  %943 = vmatpush1.bf16.msra.mxu0 0
  %944 = vmatprep.subr.bf16.mxu0 0
  %945 = vmatpush1.bf16.msra.mxu0 0
  %946 = vmatprep.subr.bf16.mxu0 0
  %947 = vmatpush1.bf16.msra.mxu0 0
  %948 = vmatprep.subr.bf16.mxu0 0
  %949 = vmatpush1.bf16.msra.mxu0 0
  %950 = vmatprep.subr.bf16.mxu0 0
  %951 = vmatpush1.bf16.msra.mxu0 0
  %952 = vmatprep.subr.bf16.mxu0 0
  %953 = vmatpush1.bf16.msra.mxu0 0
  %954 = vmatprep.mubr.bf16.mxu0 0
  %955 = vmatmul.mubr.bf16.gmra.mrb[0].mxu0 %v920
  %v956 = vpop.f32.mrb[0].mxu0
  %v957 = vadd.f32 0.0, %v956
  %v958 = vpop.f32.mrb[0].mxu0
  %v959 = vadd.f32 0.0, %v958
  %v960 = vpop.f32.mrb[0].mxu0
  %v961 = vpop.f32.mrb[0].mxu0
  %962 = vdwg.mxu0
  %s963 = scalar_lea.vmem [#allocation2], 28
  %v964 = vld [vmem:[%s963] sm:$0xf]
  %v965 = vsel %vm307, %v957, %v959
  %v966 = vadd.f32 %v964, %v965
  %v967 = vtanh.pop %v966
  %v968 = vmul.f32 %v967, %v41
  %v969 = vadd.f32 %v968, %v42
  %v970 = vmul.f32 %v969, %v902
  %972 = vrot.lane.b32.xlu0 %v969, 64
  %v973 = vpop.permute.xlu0 %972
  %v975 = vmul.f32 %v969, %v973
  %977 = vrot.lane.b32.xlu0 %v975, 32
  %v978 = vpop.permute.xlu0 %977
  %v980 = vadd.f32 %v970, %v978
  %v981 = vtanh.pop %v980
  %983 = vrot.lane.b32.xlu0 %v981, 64
  %v984 = vpop.permute.xlu0 %983
  %v986 = vmul.f32 %v969, %v984
  %988 = vrot.lane.b32.xlu0 %v986, 32
  %v989 = vpop.permute.xlu0 %988
  %s991 = scalar_lea.vmem [#allocation3], 28
  %992 = vst.msk [vmem:[%s991] sm:$0xf] %vm445, %v989
  %v993 = vld [vmem:[#allocation3] sm:$0xf]
  %v994 = vld [vmem:[#allocation3 + $0x4] sm:$0xf]
  %v995 = vld [vmem:[#allocation3 + $0x8] sm:$0xf]
  %v996 = vld [vmem:[#allocation3 + $0xc] sm:$0xf]
  %v997 = vld [vmem:[#allocation3 + $0x10] sm:$0xf]
  %v998 = vld [vmem:[#allocation3 + $0x14] sm:$0xf]
  %v999 = vld [vmem:[#allocation3 + $0x18] sm:$0xf]
  %v1000 = vld [vmem:[#allocation3 + $0x1c] sm:$0xf]
  %v1002 = vrot.slane %v1000, 2
  %v1005 = vrot.slane %v998, 6
  %v1008 = vrot.slane %v997, 4
  %v1011 = vrot.slane %v996, 2
  %v1014 = vrot.slane %v994, 6
  %v1017 = vrot.slane %v993, 4
  %vm1019 = vcmask 1041408
  %v1020 = vsel %vm1019, %v1002, %v999
  %vm1021 = vcmask 1043456
  %v1022 = vsel %vm1021, %v1020, %v1005
  %vm1023 = vcmask 1045504
  %v1024 = vsel %vm1023, %v1022, %v1008
  %v1025 = vsel %vm1019, %v1011, %v995
  %v1026 = vsel %vm1021, %v1025, %v1014
  %v1027 = vsel %vm1023, %v1026, %v1017
  %v1028 = vld [vmem:[%s6] sm:$0xff]
  %v1029 = vld [vmem:[%s6 + $0x8] sm:$0xff]
  %v1030 = vld [vmem:[%s6 + $0x10] sm:$0xff]
  %v1031 = vld [vmem:[%s6 + $0x18] sm:$0xff]
  %v1032 = vld [vmem:[%s7] sm:$0xff]
  %v1033 = vld [vmem:[%s7 + $0x8] sm:$0xff]
  %v1034 = vld [vmem:[%s7 + $0x10] sm:$0xff]
  %v1035 = vld [vmem:[%s7 + $0x18] sm:$0xff]
  %v1037 = vsel %vm373, %v1024, 0
  %v1040 = vsel %vm373, %v1027, 0
  %1042 = vmatprep.subr.mxu0 0.0
  %1043 = vmatpush1.msra.mxu0 %v1032
  %1044 = vmatprep.subr.mxu0 0.0
  %1045 = vmatpush1.msra.mxu0 %v1033
  %1046 = vmatprep.subr.mxu0 0.0
  %1047 = vmatpush1.msra.mxu0 %v1034
  %1048 = vmatprep.subr.mxu0 0.0
  %1049 = vmatpush1.msra.mxu0 %v1035
  %1050 = vmatprep.subr.mxu0 0.0
  %1051 = vmatpush1.msra.mxu0 0.0
  %1052 = vmatprep.subr.mxu0 0.0
  %1053 = vmatpush1.msra.mxu0 0.0
  %1054 = vmatprep.subr.mxu0 0.0
  %1055 = vmatpush1.msra.mxu0 0.0
  %1056 = vmatprep.subr.mxu0 0.0
  %1057 = vmatpush1.msra.mxu0 0.0
  %1058 = vmatprep.subr.mxu0 0.0
  %1059 = vmatpush1.msra.mxu0 0.0
  %1060 = vmatprep.subr.mxu0 0.0
  %1061 = vmatpush1.msra.mxu0 0.0
  %1062 = vmatprep.subr.mxu0 0.0
  %1063 = vmatpush1.msra.mxu0 0.0
  %1064 = vmatprep.subr.mxu0 0.0
  %1065 = vmatpush1.msra.mxu0 0.0
  %1066 = vmatprep.subr.mxu0 0.0
  %1067 = vmatpush1.msra.mxu0 0.0
  %1068 = vmatprep.subr.mxu0 0.0
  %1069 = vmatpush1.msra.mxu0 0.0
  %1070 = vmatprep.subr.mxu0 0.0
  %1071 = vmatpush1.msra.mxu0 0.0
  %1072 = vmatprep.subr.mxu0 0.0
  %1073 = vmatpush1.msra.mxu0 0.0
  %1074 = vmatprep.subr.mxu0 0.0
  %1075 = vmatpush1.msra.mxu0 0.0
  %1076 = vmatprep.subr.mxu0 0.0
  %1077 = vmatpush1.msra.mxu0 0.0
  %1078 = vmatprep.subr.mxu0 0.0
  %1079 = vmatpush1.msra.mxu0 0.0
  %1080 = vmatprep.subr.mxu0 0.0
  %1081 = vmatpush1.msra.mxu0 0.0
  %1082 = vmatprep.subr.mxu0 0.0
  %1083 = vmatpush1.msra.mxu0 0.0
  %1084 = vmatprep.subr.mxu0 0.0
  %1085 = vmatpush1.msra.mxu0 0.0
  %1086 = vmatprep.subr.mxu0 0.0
  %1087 = vmatpush1.msra.mxu0 0.0
  %1088 = vmatprep.subr.mxu0 0.0
  %1089 = vmatpush1.msra.mxu0 0.0
  %1090 = vmatprep.subr.mxu0 0.0
  %1091 = vmatpush1.msra.mxu0 0.0
  %1092 = vmatprep.subr.mxu0 0.0
  %1093 = vmatpush1.msra.mxu0 0.0
  %1094 = vmatprep.subr.mxu0 0.0
  %1095 = vmatpush1.msra.mxu0 0.0
  %1096 = vmatprep.subr.mxu0 0.0
  %1097 = vmatpush1.msra.mxu0 0.0
  %1098 = vmatprep.subr.mxu0 0.0
  %1099 = vmatpush1.msra.mxu0 0.0
  %1100 = vmatprep.subr.mxu0 0.0
  %1101 = vmatpush1.msra.mxu0 0.0
  %1102 = vmatprep.subr.mxu0 0.0
  %1103 = vmatpush1.msra.mxu0 0.0
  %1104 = vmatprep.subr.mxu0 0.0
  %1105 = vmatpush1.msra.mxu0 0.0
  %1106 = vmatprep.mubr.f32.mxu0 0.0
  %1107 = vmatmul.mubr.f32.gmra.mrb[0].mxu0 %v1037
  %v1108 = vpop.f32.mrb[0].mxu0
  %v1109 = vadd.f32 0.0, %v1108
  %v1110 = vpop.f32.mrb[0].mxu0
  %1111 = vmatprep.mubr.f32.mxu0 0.0
  %1112 = vmatmul.mubr.f32.gmra.mrb[0].mxu0 %v1040
  %v1113 = vpop.f32.mrb[0].mxu0
  %v1114 = vadd.f32 0.0, %v1113
  %v1115 = vpop.f32.mrb[0].mxu0
  %1116 = vdwg.mxu0
  %v1119 = vcombine.low %v993, %v994
  %v1120 = vcombine.low %v995, %v996
  %v1122 = vunpack.c.l.s4 1983009808
  %v1123 = vunpack.c.0.s8 %v1122
  %v1124 = vlaneseq
  %v1125 = vshrl.u32 %v1124, 7
  %v1126 = vsub.s32 %v1123, %v1125
  %v1127 = vrot.slane %v1119, %v1126
  %v1129 = vunpack.c.l.s4 1983009808
  %v1130 = vunpack.c.0.s8 %v1129
  %v1131 = vlaneseq
  %v1132 = vshrl.u32 %v1131, 7
  %v1133 = vsub.s32 %v1130, %v1132
  %v1134 = vrot.slane %v1120, %v1133
  %v1135 = vcombine.low %v1127, %v1134
  %v1136 = vcombine.low %v997, %v998
  %v1137 = vcombine.low %v999, %v1000
  %v1139 = vunpack.c.l.s4 1983009808
  %v1140 = vunpack.c.0.s8 %v1139
  %v1141 = vlaneseq
  %v1142 = vshrl.u32 %v1141, 7
  %v1143 = vsub.s32 %v1140, %v1142
  %v1144 = vrot.slane %v1136, %v1143
  %v1146 = vunpack.c.l.s4 1983009808
  %v1147 = vunpack.c.0.s8 %v1146
  %v1148 = vlaneseq
  %v1149 = vshrl.u32 %v1148, 7
  %v1150 = vsub.s32 %v1147, %v1149
  %v1151 = vrot.slane %v1137, %v1150
  %v1152 = vcombine.low %v1144, %v1151
  %v1153 = vsel %vm373, %v1135, 0
  %v1155 = vsel %vm373, %v1152, 0
  %1157 = vmatprep.subr.mxu0 0.0
  %1158 = vmatpush1.msra.mxu0 %v1028
  %1159 = vmatprep.subr.mxu0 0.0
  %1160 = vmatpush1.msra.mxu0 %v1029
  %1161 = vmatprep.subr.mxu0 0.0
  %1162 = vmatpush1.msra.mxu0 %v1030
  %1163 = vmatprep.subr.mxu0 0.0
  %1164 = vmatpush1.msra.mxu0 %v1031
  %1165 = vmatprep.subr.mxu0 0.0
  %1166 = vmatpush1.msra.mxu0 0.0
  %1167 = vmatprep.subr.mxu0 0.0
  %1168 = vmatpush1.msra.mxu0 0.0
  %1169 = vmatprep.subr.mxu0 0.0
  %1170 = vmatpush1.msra.mxu0 0.0
  %1171 = vmatprep.subr.mxu0 0.0
  %1172 = vmatpush1.msra.mxu0 0.0
  %1173 = vmatprep.subr.mxu0 0.0
  %1174 = vmatpush1.msra.mxu0 0.0
  %1175 = vmatprep.subr.mxu0 0.0
  %1176 = vmatpush1.msra.mxu0 0.0
  %1177 = vmatprep.subr.mxu0 0.0
  %1178 = vmatpush1.msra.mxu0 0.0
  %1179 = vmatprep.subr.mxu0 0.0
  %1180 = vmatpush1.msra.mxu0 0.0
  %1181 = vmatprep.subr.mxu0 0.0
  %1182 = vmatpush1.msra.mxu0 0.0
  %1183 = vmatprep.subr.mxu0 0.0
  %1184 = vmatpush1.msra.mxu0 0.0
  %1185 = vmatprep.subr.mxu0 0.0
  %1186 = vmatpush1.msra.mxu0 0.0
  %1187 = vmatprep.subr.mxu0 0.0
  %1188 = vmatpush1.msra.mxu0 0.0
  %1189 = vmatprep.subr.mxu0 0.0
  %1190 = vmatpush1.msra.mxu0 0.0
  %1191 = vmatprep.subr.mxu0 0.0
  %1192 = vmatpush1.msra.mxu0 0.0
  %1193 = vmatprep.subr.mxu0 0.0
  %1194 = vmatpush1.msra.mxu0 0.0
  %1195 = vmatprep.subr.mxu0 0.0
  %1196 = vmatpush1.msra.mxu0 0.0
  %1197 = vmatprep.subr.mxu0 0.0
  %1198 = vmatpush1.msra.mxu0 0.0
  %1199 = vmatprep.subr.mxu0 0.0
  %1200 = vmatpush1.msra.mxu0 0.0
  %1201 = vmatprep.subr.mxu0 0.0
  %1202 = vmatpush1.msra.mxu0 0.0
  %1203 = vmatprep.subr.mxu0 0.0
  %1204 = vmatpush1.msra.mxu0 0.0
  %1205 = vmatprep.subr.mxu0 0.0
  %1206 = vmatpush1.msra.mxu0 0.0
  %1207 = vmatprep.subr.mxu0 0.0
  %1208 = vmatpush1.msra.mxu0 0.0
  %1209 = vmatprep.subr.mxu0 0.0
  %1210 = vmatpush1.msra.mxu0 0.0
  %1211 = vmatprep.subr.mxu0 0.0
  %1212 = vmatpush1.msra.mxu0 0.0
  %1213 = vmatprep.subr.mxu0 0.0
  %1214 = vmatpush1.msra.mxu0 0.0
  %1215 = vmatprep.subr.mxu0 0.0
  %1216 = vmatpush1.msra.mxu0 0.0
  %1217 = vmatprep.subr.mxu0 0.0
  %1218 = vmatpush1.msra.mxu0 0.0
  %1219 = vmatprep.subr.mxu0 0.0
  %1220 = vmatpush1.msra.mxu0 0.0
  %1221 = vmatprep.mubr.f32.mxu0 0.0
  %1222 = vmatmul.mubr.f32.gmra.mrb[0].mxu0 %v1153
  %v1223 = vpop.f32.mrb[0].mxu0
  %v1224 = vadd.f32 %v1109, %v1223
  %v1225 = vpop.f32.mrb[0].mxu0
  %1226 = vmatprep.mubr.f32.mxu0 0.0
  %1227 = vmatmul.mubr.f32.gmra.mrb[0].mxu0 %v1155
  %v1228 = vpop.f32.mrb[0].mxu0
  %v1229 = vadd.f32 %v1114, %v1228
  %v1230 = vpop.f32.mrb[0].mxu0
  %1231 = vdwg.mxu0
  %v1232 = vld [vmem:[%s8] sm:$0x1]
  %v1234 = vlaneseq
  %v1235 = vshrl.u32 %v1234, 7
  %v1236 = vsub.s32 0, %v1235
  %v1237 = vrot.slane %v1232, %v1236
  %v1239 = vadd.f32 %v1224, %v1237
  %v1240 = vadd.f32 %v1229, %v1237
  %v1241 = vtanh.pop %v1239
  %v1242 = vtanh.pop %v1240
  %1243 = vst.msk [vmem:[%s9] sm:$0xff] %vm373, %v1241
  %1244 = vst.msk [vmem:[%s9 + $0x8] sm:$0xff] %vm373, %v1242
  // Predicated region
  $region38: #{_ae_textencoder_impl.1} parent=0 // pred_check
    _
  $region39: #{_ae_textencoder_impl.1} parent=0 // pred_check_branch
    %1246 = sbr.rel (0) target = $region41
  $region40: #{_ae_textencoder_impl.1} parent=0 // pred_region
    _
  $region41: #{_ae_textencoder_impl.1} parent=0 // pred_fallthru
    _
  // Predicated region
  $region42: #{_ae_textencoder_impl.1} parent=0 // pred_check
    _
  $region43: #{_ae_textencoder_impl.1} parent=0 // pred_check_branch
    %1248 = sbr.rel (0) target = $region45
  $region44: #{_ae_textencoder_impl.1} parent=0 // pred_region
    _
  $region45: #{_ae_textencoder_impl.1} parent=0 // pred_fallthru
    _

</llo_original>
